<compile_context>
chip_gen: v6e
topology: v6e:2x2x1
jax: 0.10.0
libtpu: 0.0.40
codegen_flags: <defaults>
</compile_context>

<pallas_src>
import math

import jax
import jax.numpy as jnp
from jax.experimental import pallas as pl
from jax.experimental.pallas import tpu as pltpu

# ---------------- configuration (small, consistent with the module) ---------
B = 2                 # batch
S = 8                 # seq_len
D = 64                # hidden_size
H = 4                 # num_attention_heads
KV = 2                # num_key_value_heads
HDIM = D // H         # head_size = 16
HD2 = HDIM // 2
N_REP = H // KV
N = B * S             # flattened rows = 16
HD = H * HDIM         # 64  (q/k/v feature columns, all heads)
HN = H * N            # 64  (score columns, all heads)
FFN = 64 * ((int(2 * (4 * D) / 3) + 63) // 64)   # 192 (same formula as module)
FFN_P = 256                                      # padded to a 128-lane multiple
QKV_COLS = 5 * HD                                # [q | q_swap | k | k_swap | v] = 320
EPS = 1e-5
ROPE_THETA = 10000.0
SCALE = 1.0 / math.sqrt(HDIM)


# ------------------------------- kernel -------------------------------------
def decoder_layer_kernel(x_ref, cos_ref, sin_ref, bias_ref, bdf_ref, bdo_ref,
                         attn_nw_ref, wqkv_ref, wo_ref, ffn_nw_ref,
                         w13_hbm_ref, w2_hbm_ref,
                         out_ref,
                         w13_vmem, w2_vmem, dma_sem):
    # Kick off the FFN-weight DMAs immediately; they overlap the attention block.
    w13_cp = pltpu.make_async_copy(w13_hbm_ref, w13_vmem, dma_sem.at[0])
    w2_cp = pltpu.make_async_copy(w2_hbm_ref, w2_vmem, dma_sem.at[1])
    w13_cp.start()
    w2_cp.start()

    x = x_ref[...]               # (N, D)     f32, batch flattened along rows
    cos = cos_ref[...]           # (N, HD)    [cos|cos] per head, tiled over heads
    sin = sin_ref[...]           # (N, HD)    [-sin|sin] per head, tiled over heads
    bias = bias_ref[...]         # (N, HN)    additive causal/batch mask (0 / -1e30)
    bdf = bdf_ref[...]           # (HN, HD)   block-diagonal ones (key rows x features)
    bdo = bdo_ref[...]           # (HN, HN)   block-diagonal ones (key rows x score cols)

    def rmsnorm(v, w):           # v: (N, D), w: (1, D) -- all f32
        ms = jnp.mean(v * v, axis=-1, keepdims=True)
        return w * (v * jax.lax.rsqrt(ms + EPS))

    # ---------------- attention ----------------
    h1 = rmsnorm(x, attn_nw_ref[...])

    # Fused QKV projection (bf16 operands, f32 accumulation).
    qkv = jnp.dot(h1.astype(jnp.bfloat16), wqkv_ref[...],
                  preferred_element_type=jnp.float32)            # (N, 320)

    # RoPE on full slabs: half-swap & kv->head expansion are folded into the
    # extra wqkv columns; 1/sqrt(HDIM) is folded into the q columns.
    q = qkv[:, 0 * HD:1 * HD] * cos + qkv[:, 1 * HD:2 * HD] * sin   # (N, 64) roped+scaled q
    k = qkv[:, 2 * HD:3 * HD] * cos + qkv[:, 3 * HD:4 * HD] * sin   # (N, 64) roped k (per q-head)
    v = qkv[:, 4 * HD:5 * HD]                                       # (N, 64) v (per q-head)

    # Block-diagonal RHS operands: diagonal block h holds head h's K / V tile.
    k_bd = jnp.concatenate([k] * H, axis=0) * bdf                   # (HN, HD)
    v_bd = jnp.concatenate([v] * H, axis=0) * bdf                   # (HN, HD)

    # All-head scores in ONE matmul (contract the feature dim of both operands).
    s = jax.lax.dot_general(q.astype(jnp.bfloat16), k_bd.astype(jnp.bfloat16),
                            (((1,), (1,)), ((), ())),
                            preferred_element_type=jnp.float32)     # (N, HN) f32
    s = s + bias
    # Per-row global max is constant within every 16-column head segment, so the
    # per-head softmax is invariant to it.  (A head whose scores are ~90 smaller
    # than another head's would underflow; irrelevant at these magnitudes.)
    m = jnp.max(s, axis=-1, keepdims=True)
    e = jnp.exp(s - m)                                               # masked -> 0

    # One matmul yields both the PV numerator and the per-head denominator.
    rhs = jnp.concatenate([v_bd, bdo], axis=1)                       # (HN, HD + HN)
    pv = jnp.dot(e.astype(jnp.bfloat16), rhs.astype(jnp.bfloat16),
                 preferred_element_type=jnp.float32)                 # (N, 128)
    o_all = pv[:, :HD] * pl.reciprocal(pv[:, HD:], approx=True)     # (N, HD)

    # Single fused output projection over all heads.
    attn = jnp.dot(o_all.astype(jnp.bfloat16), wo_ref[...],
                   preferred_element_type=jnp.float32)               # (N, D)
    h_res = x + attn

    # ---------------- feed-forward (SwiGLU), fused + zero-padded w1|w3 -------
    h2 = rmsnorm(h_res, ffn_nw_ref[...])
    w13_cp.wait()                                                    # FFN weights ready
    gu = jnp.dot(h2.astype(jnp.bfloat16), w13_vmem[...],
                 preferred_element_type=jnp.float32)                 # (N, 2*FFN_P)
    g = gu[:, :FFN_P]
    u = gu[:, FFN_P:]
    act = g * jax.nn.sigmoid(g) * u                                  # f32 (exact on padding)
    w2_cp.wait()
    ffn = jnp.dot(act.astype(jnp.bfloat16), w2_vmem[...],
                  preferred_element_type=jnp.float32)                # (N, D)

    out_ref[...] = h_res + ffn


# ------------------------------- wrapper -------------------------------------
@jax.jit
def decoder_layer(x_flat, cos64, sin64, bias64, bd_feat, bd_ones,
                  attn_nw, wqkv, wo, ffn_nw, w13, w2):
    grid_spec = pltpu.PrefetchScalarGridSpec(
        num_scalar_prefetch=0,
        grid=(1,),                                            # whole layer, one step
        in_specs=[
            pl.BlockSpec((N, D), lambda i: (0, 0)),           # x (flattened)
            pl.BlockSpec((N, HD), lambda i: (0, 0)),          # cos table (head-tiled)
            pl.BlockSpec((N, HD), lambda i: (0, 0)),          # sin table (head-tiled)
            pl.BlockSpec((N, HN), lambda i: (0, 0)),          # additive mask bias
            pl.BlockSpec((HN, HD), lambda i: (0, 0)),         # block-diag ones (features)
            pl.BlockSpec((HN, HN), lambda i: (0, 0)),         # block-diag ones (scores)
            pl.BlockSpec((1, D), lambda i: (0, 0)),           # attention_norm.weight
            pl.BlockSpec((D, QKV_COLS), lambda i: (0, 0)),    # fused [q|qP|k|kP|v] (bf16)
            pl.BlockSpec((HD, D), lambda i: (0, 0)),          # wo (bf16)
            pl.BlockSpec((1, D), lambda i: (0, 0)),           # ffn_norm.weight
            pl.BlockSpec(memory_space=pl.ANY),                # w13 (HBM, manual DMA)
            pl.BlockSpec(memory_space=pl.ANY),                # w2  (HBM, manual DMA)
        ],
        out_specs=pl.BlockSpec((N, D), lambda i: (0, 0)),
        scratch_shapes=[
            pltpu.VMEM((D, 2 * FFN_P), jnp.bfloat16),         # w13 landing buffer
            pltpu.VMEM((FFN_P, D), jnp.bfloat16),             # w2 landing buffer
            pltpu.SemaphoreType.DMA((2,)),
        ],
    )
    out = pl.pallas_call(
        decoder_layer_kernel,
        out_shape=jax.ShapeDtypeStruct((N, D), jnp.float32),
        grid_spec=grid_spec,
        compiler_params=pltpu.CompilerParams(
            dimension_semantics=("arbitrary",)),
    )(x_flat, cos64, sin64, bias64, bd_feat, bd_ones,
      attn_nw, wqkv, wo, ffn_nw, w13, w2)
    return out.reshape(B, S, D)


# ----------------------- pure-JAX reference (torch semantics) ----------------
def _rmsnorm_ref(x, w):
    ms = jnp.mean(x * x, axis=-1, keepdims=True)
    return w * (x * jax.lax.rsqrt(ms + EPS))


def reference_forward(x, cos, sin, prm):
    h1 = _rmsnorm_ref(x, prm["attn_norm"])
    q = (h1 @ prm["wq"]).reshape(B, S, H, HDIM)
    k = (h1 @ prm["wk"]).reshape(B, S, KV, HDIM)
    v = (h1 @ prm["wv"]).reshape(B, S, KV, HDIM)

    def rope_interleaved(t):                    # exact apply_rotary_emb semantics
        re = t[..., 0::2]
        im = t[..., 1::2]
        c = cos[None, :, None, :]
        s = sin[None, :, None, :]
        out = jnp.stack([re * c - im * s, re * s + im * c], axis=-1)
        return out.reshape(t.shape)

    q = rope_interleaved(q)
    k = rope_interleaved(k)
    k = jnp.repeat(k, N_REP, axis=2)            # repeat_kv
    v = jnp.repeat(v, N_REP, axis=2)

    qT = q.transpose(0, 2, 1, 3)
    kT = k.transpose(0, 2, 1, 3)
    vT = v.transpose(0, 2, 1, 3)
    scores = jnp.einsum("bhqd,bhkd->bhqk", qT, kT) / math.sqrt(HDIM)
    causal = jnp.tril(jnp.ones((S, S), bool))
    scores = jnp.where(causal, scores, -1e30)
    p = jax.nn.softmax(scores, axis=-1)
    o = jnp.einsum("bhqk,bhkd->bhqd", p, vT).transpose(0, 2, 1, 3).reshape(B, S, H * HDIM)

    h = x + o @ prm["wo"]
    h2 = _rmsnorm_ref(h, prm["ffn_norm"])
    out = h + (jax.nn.silu(h2 @ prm["w1"]) * (h2 @ prm["w3"])) @ prm["w2"]
    return out


# ------------------------------- main ----------------------------------------
if __name__ == "__main__":
    key = jax.random.PRNGKey(0)
    ks = jax.random.split(key, 9)

    x = jax.random.normal(ks[0], (B, S, D), jnp.float32)

    init = lambda k, shape: 0.05 * jax.random.normal(k, shape, jnp.float32)
    prm = {
        "attn_norm": jnp.ones((D,), jnp.float32),     # RMSNorm init = ones
        "ffn_norm": jnp.ones((D,), jnp.float32),
        "wq": init(ks[1], (D, H * HDIM)),             # (in, out) layout == x @ W
        "wk": init(ks[2], (D, KV * HDIM)),
        "wv": init(ks[3], (D, KV * HDIM)),
        "wo": init(ks[4], (H * HDIM, D)),
        "w1": init(ks[5], (D, FFN)),
        "w2": init(ks[6], (FFN, D)),
        "w3": init(ks[7], (D, FFN)),
    }

    # pos_cis -> cos/sin tables, shape (S, HDIM//2)
    freqs = 1.0 / (ROPE_THETA ** (jnp.arange(0, HDIM, 2, dtype=jnp.float32) / HDIM))
    angles = jnp.arange(S, dtype=jnp.float32)[:, None] * freqs[None, :]
    cos_t = jnp.cos(angles)
    sin_t = jnp.sin(angles)

    # ---- wrapper-side weight/table plumbing (done once, outside the kernel) ----
    # Per-head column permutations:
    #   perm      : interleaved (re,im,re,im,...) -> [re...|im...]
    #   perm_swap : interleaved                    -> [im...|re...]   (the RoPE half-swap)
    perm = jnp.concatenate([jnp.arange(0, HDIM, 2), jnp.arange(1, HDIM, 2)])
    swap = jnp.concatenate([jnp.arange(HD2, HDIM), jnp.arange(0, HD2)])
    perm_swap = perm[swap]

    def per_head(idx, n_heads):
        return jnp.concatenate([h * HDIM + idx for h in range(n_heads)])

    def kv_expand(w):             # (D, KV*HDIM) -> (D, H*HDIM): repeat_kv on the weight side
        blocks = [w[:, kv * HDIM:(kv + 1) * HDIM]
                  for kv in range(KV) for _ in range(N_REP)]
        return jnp.concatenate(blocks, axis=1)

    wq_p = prm["wq"][:, per_head(perm, H)] * SCALE        # scaled, [re|im] layout
    wq_s = prm["wq"][:, per_head(perm_swap, H)] * SCALE   # scaled, [im|re] layout
    wk_p = kv_expand(prm["wk"][:, per_head(perm, KV)])    # expanded to all q heads
    wk_s = kv_expand(prm["wk"][:, per_head(perm_swap, KV)])
    wv_e = kv_expand(prm["wv"])
    wqkv = jnp.concatenate([wq_p, wq_s, wk_p, wk_s, wv_e],
                           axis=1).astype(jnp.bfloat16)   # (D, 320)
    wo_b = prm["wo"].astype(jnp.bfloat16)                 # (64, 64)

    # Fused, zero-padded SwiGLU weights (exact: padded gate cols give silu(0)*0=0
    # and the padded w2 rows are zero anyway).
    w1p = jnp.pad(prm["w1"], ((0, 0), (0, FFN_P - FFN)))
    w3p = jnp.pad(prm["w3"], ((0, 0), (0, FFN_P - FFN)))
    w13 = jnp.concatenate([w1p, w3p], axis=-1).astype(jnp.bfloat16)        # (64, 512)
    w2p = jnp.pad(prm["w2"], ((0, FFN_P - FFN), (0, 0))).astype(jnp.bfloat16)  # (256, 64)

    # Full-width RoPE tables in the per-head [re|im] layout, tiled over batch rows
    # and over the H head blocks (so RoPE applies to whole (N, 64) slabs).
    cos_head = jnp.concatenate([cos_t, cos_t], axis=-1)                    # (S, HDIM)
    sin_head = jnp.concatenate([-sin_t, sin_t], axis=-1)                   # (S, HDIM)
    cos64 = jnp.tile(jnp.tile(cos_head, (B, 1)), (1, H))                   # (N, H*HDIM)
    sin64 = jnp.tile(jnp.tile(sin_head, (B, 1)), (1, H))

    # Additive causal + block-diagonal (per-batch) mask, tiled over head segments.
    row = jnp.arange(N)[:, None]
    col = jnp.arange(N)[None, :]
    allowed = (row // S == col // S) & (col <= row)
    bias64 = jnp.tile(jnp.where(allowed, 0.0, -1e30).astype(jnp.float32), (1, H))

    # Block-diagonal 0/1 masks used to assemble the per-head K / V operands and
    # the softmax-denominator "ones" block.  (Here N == HDIM == 16 so both are
    # 64x64 with 16x16 diagonal blocks.)
    rblk = jnp.arange(HN)[:, None] // N
    bd_feat = (rblk == (jnp.arange(HD)[None, :] // HDIM)).astype(jnp.float32)  # (HN, HD)
    bd_ones = (rblk == (jnp.arange(HN)[None, :] // N)).astype(jnp.float32)     # (HN, HN)

    x_flat = x.reshape(N, D)

    out = decoder_layer(
        x_flat, cos64, sin64, bias64, bd_feat, bd_ones,
        prm["attn_norm"].reshape(1, D), wqkv, wo_b,
        prm["ffn_norm"].reshape(1, D), w13, w2p,
    )
    out = jax.block_until_ready(out)

    ref = reference_forward(x, cos_t, sin_t, prm)
    assert out.shape == (B, S, D)
    # Tolerance budget: bf16 matmul operands (weights + activations at dot sites)
    # plus the EUP approximate reciprocal in the softmax; expected max abs error
    # is a few 1e-3 on O(1) outputs, so 1e-2 is a comfortable-but-meaningful bound.
    assert jnp.allclose(out, ref, rtol=1e-2, atol=1e-2), \
        f"max abs err {jnp.max(jnp.abs(out - ref))}"

    print("KERNEL_OK")
</pallas_src>

<mosaic_0001>
module attributes {stable_mosaic.version = 11 : i64} {
  func.func @decoder_layer_kernel(%arg0: i32, %arg1: memref<16x64xf32, #tpu.memory_space<vmem>>, %arg2: memref<16x64xf32, #tpu.memory_space<vmem>>, %arg3: memref<16x64xf32, #tpu.memory_space<vmem>>, %arg4: memref<16x64xf32, #tpu.memory_space<vmem>>, %arg5: memref<64x64xf32, #tpu.memory_space<vmem>>, %arg6: memref<64x64xf32, #tpu.memory_space<vmem>>, %arg7: memref<1x64xf32, #tpu.memory_space<vmem>>, %arg8: memref<64x320xbf16, #tpu.memory_space<vmem>>, %arg9: memref<64x64xbf16, #tpu.memory_space<vmem>>, %arg10: memref<1x64xf32, #tpu.memory_space<vmem>>, %arg11: memref<64x512xbf16, #tpu.memory_space<any>>, %arg12: memref<256x64xbf16, #tpu.memory_space<any>>, %arg13: memref<16x64xf32, #tpu.memory_space<vmem>>, %arg14: memref<64x512xbf16, #tpu.memory_space<vmem>>, %arg15: memref<256x64xbf16, #tpu.memory_space<vmem>>, %arg16: memref<2x!tpu.dma_semaphore, #tpu.memory_space<semaphore_mem>>) attributes {dimension_semantics = [#tpu.dimension_semantics<arbitrary>], iteration_bounds = array<i64: 1>, scalar_prefetch = 0 : i64, scratch_operands = 3 : i64, tpu.core_type = #tpu.core_type<tc>, window_params = [{pipeline_mode = #tpu.pipeline_mode<synchronous>, transform_indices = @transform_0, window_bounds = array<i64: 16, 64>}, {pipeline_mode = #tpu.pipeline_mode<synchronous>, transform_indices = @transform_1, window_bounds = array<i64: 16, 64>}, {pipeline_mode = #tpu.pipeline_mode<synchronous>, transform_indices = @transform_2, window_bounds = array<i64: 16, 64>}, {pipeline_mode = #tpu.pipeline_mode<synchronous>, transform_indices = @transform_3, window_bounds = array<i64: 16, 64>}, {pipeline_mode = #tpu.pipeline_mode<synchronous>, transform_indices = @transform_4, window_bounds = array<i64: 64, 64>}, {pipeline_mode = #tpu.pipeline_mode<synchronous>, transform_indices = @transform_5, window_bounds = array<i64: 64, 64>}, {pipeline_mode = #tpu.pipeline_mode<synchronous>, transform_indices = @transform_6, window_bounds = array<i64: 1, 64>}, {pipeline_mode = #tpu.pipeline_mode<synchronous>, transform_indices = @transform_7, window_bounds = array<i64: 64, 320>}, {pipeline_mode = #tpu.pipeline_mode<synchronous>, transform_indices = @transform_8, window_bounds = array<i64: 64, 64>}, {pipeline_mode = #tpu.pipeline_mode<synchronous>, transform_indices = @transform_9, window_bounds = array<i64: 1, 64>}, {}, {}, {pipeline_mode = #tpu.pipeline_mode<synchronous>, transform_indices = @transform_12, window_bounds = array<i64: 16, 64>}]} {
    %c0_i32 = arith.constant 0 : i32
    %0 = tpu.memref_slice %arg16[%c0_i32] : memref<2x!tpu.dma_semaphore, #tpu.memory_space<semaphore_mem>> -> memref<1x!tpu.dma_semaphore, #tpu.memory_space<semaphore_mem>>
    %1 = tpu.memref_squeeze %0 : memref<1x!tpu.dma_semaphore, #tpu.memory_space<semaphore_mem>> -> memref<!tpu.dma_semaphore, #tpu.memory_space<semaphore_mem>>
    tpu.enqueue_dma source(%arg11 : memref<64x512xbf16, #tpu.memory_space<any>>) target(%arg14 : memref<64x512xbf16, #tpu.memory_space<vmem>>) target_semaphore(%1 : memref<!tpu.dma_semaphore, #tpu.memory_space<semaphore_mem>>)
    %c1_i32 = arith.constant 1 : i32
    %2 = tpu.memref_slice %arg16[%c1_i32] : memref<2x!tpu.dma_semaphore, #tpu.memory_space<semaphore_mem>> -> memref<1x!tpu.dma_semaphore, #tpu.memory_space<semaphore_mem>>
    %3 = tpu.memref_squeeze %2 : memref<1x!tpu.dma_semaphore, #tpu.memory_space<semaphore_mem>> -> memref<!tpu.dma_semaphore, #tpu.memory_space<semaphore_mem>>
    tpu.enqueue_dma source(%arg12 : memref<256x64xbf16, #tpu.memory_space<any>>) target(%arg15 : memref<256x64xbf16, #tpu.memory_space<vmem>>) target_semaphore(%3 : memref<!tpu.dma_semaphore, #tpu.memory_space<semaphore_mem>>)
    %c0 = arith.constant 0 : index
    %c0_0 = arith.constant 0 : index
    %4 = vector.load %arg1[%c0, %c0_0] : memref<16x64xf32, #tpu.memory_space<vmem>>, vector<16x64xf32>
    %c0_1 = arith.constant 0 : index
    %c0_2 = arith.constant 0 : index
    %5 = vector.load %arg2[%c0_1, %c0_2] : memref<16x64xf32, #tpu.memory_space<vmem>>, vector<16x64xf32>
    %c0_3 = arith.constant 0 : index
    %c0_4 = arith.constant 0 : index
    %6 = vector.load %arg3[%c0_3, %c0_4] : memref<16x64xf32, #tpu.memory_space<vmem>>, vector<16x64xf32>
    %c0_5 = arith.constant 0 : index
    %c0_6 = arith.constant 0 : index
    %7 = vector.load %arg4[%c0_5, %c0_6] : memref<16x64xf32, #tpu.memory_space<vmem>>, vector<16x64xf32>
    %c0_7 = arith.constant 0 : index
    %c0_8 = arith.constant 0 : index
    %8 = vector.load %arg5[%c0_7, %c0_8] : memref<64x64xf32, #tpu.memory_space<vmem>>, vector<64x64xf32>
    %c0_9 = arith.constant 0 : index
    %c0_10 = arith.constant 0 : index
    %9 = vector.load %arg6[%c0_9, %c0_10] : memref<64x64xf32, #tpu.memory_space<vmem>>, vector<64x64xf32>
    %c0_11 = arith.constant 0 : index
    %c0_12 = arith.constant 0 : index
    %10 = vector.load %arg7[%c0_11, %c0_12] : memref<1x64xf32, #tpu.memory_space<vmem>>, vector<1x64xf32>
    %11 = arith.mulf %4, %4 : vector<16x64xf32>
    %cst = arith.constant dense<0.000000e+00> : vector<16xf32>
    %12 = vector.multi_reduction <add>, %11, %cst [1] : vector<16x64xf32> to vector<16xf32>
    %13 = vector.shape_cast %12 : vector<16xf32> to vector<16x1xf32>
    %cst_13 = arith.constant 6.400000e+01 : f32
    %14 = vector.broadcast %cst_13 : f32 to vector<16x1xf32>
    %15 = arith.divf %13, %14 : vector<16x1xf32>
    %cst_14 = arith.constant 9.99999974E-6 : f32
    %16 = vector.broadcast %cst_14 : f32 to vector<16x1xf32>
    %17 = arith.addf %15, %16 : vector<16x1xf32>
    %18 = math.rsqrt %17 : vector<16x1xf32>
    %19 = vector.broadcast %18 : vector<16x1xf32> to vector<16x64xf32>
    %20 = arith.mulf %4, %19 : vector<16x64xf32>
    %21 = vector.broadcast %10 : vector<1x64xf32> to vector<16x64xf32>
    %22 = arith.mulf %21, %20 : vector<16x64xf32>
    %23 = arith.truncf %22 : vector<16x64xf32> to vector<16x64xbf16>
    %c0_15 = arith.constant 0 : index
    %c0_16 = arith.constant 0 : index
    %24 = vector.load %arg8[%c0_15, %c0_16] : memref<64x320xbf16, #tpu.memory_space<vmem>>, vector<64x320xbf16>
    %cst_17 = arith.constant dense<0.000000e+00> : vector<16x320xf32>
    %25 = tpu.matmul %23, %24, %cst_17 {dimension_numbers = #tpu.dot_dimension_numbers<[1], [0], [0], [1], [0, 0, 1, 1], [], []>} : vector<16x64xbf16>, vector<64x320xbf16>, vector<16x320xf32> -> vector<16x320xf32>
    %26 = vector.extract_strided_slice %25 {offsets = [0, 0], sizes = [16, 64], strides = [1, 1]} : vector<16x320xf32> to vector<16x64xf32>
    %27 = arith.mulf %26, %5 : vector<16x64xf32>
    %28 = vector.extract_strided_slice %25 {offsets = [0, 64], sizes = [16, 64], strides = [1, 1]} : vector<16x320xf32> to vector<16x64xf32>
    %29 = arith.mulf %28, %6 : vector<16x64xf32>
    %30 = arith.addf %27, %29 : vector<16x64xf32>
    %31 = vector.extract_strided_slice %25 {offsets = [0, 128], sizes = [16, 64], strides = [1, 1]} : vector<16x320xf32> to vector<16x64xf32>
    %32 = arith.mulf %31, %5 : vector<16x64xf32>
    %33 = vector.extract_strided_slice %25 {offsets = [0, 192], sizes = [16, 64], strides = [1, 1]} : vector<16x320xf32> to vector<16x64xf32>
    %34 = arith.mulf %33, %6 : vector<16x64xf32>
    %35 = arith.addf %32, %34 : vector<16x64xf32>
    %36 = vector.extract_strided_slice %25 {offsets = [0, 256], sizes = [16, 64], strides = [1, 1]} : vector<16x320xf32> to vector<16x64xf32>
    %37 = tpu.concatenate %35, %35, %35, %35 in 0 : vector<16x64xf32>, vector<16x64xf32>, vector<16x64xf32>, vector<16x64xf32> -> vector<64x64xf32>
    %38 = arith.mulf %37, %8 : vector<64x64xf32>
    %39 = tpu.concatenate %36, %36, %36, %36 in 0 : vector<16x64xf32>, vector<16x64xf32>, vector<16x64xf32>, vector<16x64xf32> -> vector<64x64xf32>
    %40 = arith.mulf %39, %8 : vector<64x64xf32>
    %41 = arith.truncf %30 : vector<16x64xf32> to vector<16x64xbf16>
    %42 = arith.truncf %38 : vector<64x64xf32> to vector<64x64xbf16>
    %cst_18 = arith.constant dense<0.000000e+00> : vector<16x64xf32>
    %43 = tpu.matmul %41, %42, %cst_18 {dimension_numbers = #tpu.dot_dimension_numbers<[1], [1], [0], [0], [0, 0, 1, 0], [], []>} : vector<16x64xbf16>, vector<64x64xbf16>, vector<16x64xf32> -> vector<16x64xf32>
    %44 = arith.addf %43, %7 : vector<16x64xf32>
    %cst_19 = arith.constant dense<0xFF800000> : vector<16xf32>
    %45 = vector.multi_reduction <maximumf>, %44, %cst_19 [1] : vector<16x64xf32> to vector<16xf32>
    %46 = vector.shape_cast %45 : vector<16xf32> to vector<16x1xf32>
    %47 = vector.broadcast %46 : vector<16x1xf32> to vector<16x64xf32>
    %48 = arith.subf %44, %47 : vector<16x64xf32>
    %49 = math.exp %48 : vector<16x64xf32>
    %50 = tpu.concatenate %40, %9 in 1 : vector<64x64xf32>, vector<64x64xf32> -> vector<64x128xf32>
    %51 = arith.truncf %49 : vector<16x64xf32> to vector<16x64xbf16>
    %52 = arith.truncf %50 : vector<64x128xf32> to vector<64x128xbf16>
    %cst_20 = arith.constant dense<0.000000e+00> : vector<16x128xf32>
    %53 = tpu.matmul %51, %52, %cst_20 {dimension_numbers = #tpu.dot_dimension_numbers<[1], [0], [0], [1], [0, 0, 1, 1], [], []>} : vector<16x64xbf16>, vector<64x128xbf16>, vector<16x128xf32> -> vector<16x128xf32>
    %54 = vector.extract_strided_slice %53 {offsets = [0, 0], sizes = [16, 64], strides = [1, 1]} : vector<16x128xf32> to vector<16x64xf32>
    %55 = vector.extract_strided_slice %53 {offsets = [0, 64], sizes = [16, 64], strides = [1, 1]} : vector<16x128xf32> to vector<16x64xf32>
    %56 = tpu.reciprocal %55 {approx = true} : vector<16x64xf32> -> vector<16x64xf32>
    %57 = arith.mulf %54, %56 : vector<16x64xf32>
    %58 = arith.truncf %57 : vector<16x64xf32> to vector<16x64xbf16>
    %c0_21 = arith.constant 0 : index
    %c0_22 = arith.constant 0 : index
    %59 = vector.load %arg9[%c0_21, %c0_22] : memref<64x64xbf16, #tpu.memory_space<vmem>>, vector<64x64xbf16>
    %cst_23 = arith.constant dense<0.000000e+00> : vector<16x64xf32>
    %60 = tpu.matmul %58, %59, %cst_23 {dimension_numbers = #tpu.dot_dimension_numbers<[1], [0], [0], [1], [0, 0, 1, 1], [], []>} : vector<16x64xbf16>, vector<64x64xbf16>, vector<16x64xf32> -> vector<16x64xf32>
    %61 = arith.addf %4, %60 : vector<16x64xf32>
    %c0_24 = arith.constant 0 : index
    %c0_25 = arith.constant 0 : index
    %62 = vector.load %arg10[%c0_24, %c0_25] : memref<1x64xf32, #tpu.memory_space<vmem>>, vector<1x64xf32>
    %63 = arith.mulf %61, %61 : vector<16x64xf32>
    %cst_26 = arith.constant dense<0.000000e+00> : vector<16xf32>
    %64 = vector.multi_reduction <add>, %63, %cst_26 [1] : vector<16x64xf32> to vector<16xf32>
    %65 = vector.shape_cast %64 : vector<16xf32> to vector<16x1xf32>
    %cst_27 = arith.constant 6.400000e+01 : f32
    %66 = vector.broadcast %cst_27 : f32 to vector<16x1xf32>
    %67 = arith.divf %65, %66 : vector<16x1xf32>
    %cst_28 = arith.constant 9.99999974E-6 : f32
    %68 = vector.broadcast %cst_28 : f32 to vector<16x1xf32>
    %69 = arith.addf %67, %68 : vector<16x1xf32>
    %70 = math.rsqrt %69 : vector<16x1xf32>
    %71 = vector.broadcast %70 : vector<16x1xf32> to vector<16x64xf32>
    %72 = arith.mulf %61, %71 : vector<16x64xf32>
    %73 = vector.broadcast %62 : vector<1x64xf32> to vector<16x64xf32>
    %74 = arith.mulf %73, %72 : vector<16x64xf32>
    %c0_i32_29 = arith.constant 0 : i32
    %75 = tpu.memref_slice %arg16[%c0_i32_29] : memref<2x!tpu.dma_semaphore, #tpu.memory_space<semaphore_mem>> -> memref<1x!tpu.dma_semaphore, #tpu.memory_space<semaphore_mem>>
    %76 = tpu.memref_squeeze %75 : memref<1x!tpu.dma_semaphore, #tpu.memory_space<semaphore_mem>> -> memref<!tpu.dma_semaphore, #tpu.memory_space<semaphore_mem>>
    tpu.wait_dma2 semaphore(%76 : memref<!tpu.dma_semaphore, #tpu.memory_space<semaphore_mem>>) src(%arg11 : memref<64x512xbf16, #tpu.memory_space<any>>) dst(%arg14 : memref<64x512xbf16, #tpu.memory_space<vmem>>)
    %77 = arith.truncf %74 : vector<16x64xf32> to vector<16x64xbf16>
    %c0_30 = arith.constant 0 : index
    %c0_31 = arith.constant 0 : index
    %78 = vector.load %arg14[%c0_30, %c0_31] : memref<64x512xbf16, #tpu.memory_space<vmem>>, vector<64x512xbf16>
    %cst_32 = arith.constant dense<0.000000e+00> : vector<16x512xf32>
    %79 = tpu.matmul %77, %78, %cst_32 {dimension_numbers = #tpu.dot_dimension_numbers<[1], [0], [0], [1], [0, 0, 1, 1], [], []>} : vector<16x64xbf16>, vector<64x512xbf16>, vector<16x512xf32> -> vector<16x512xf32>
    %80 = vector.extract_strided_slice %79 {offsets = [0, 0], sizes = [16, 256], strides = [1, 1]} : vector<16x512xf32> to vector<16x256xf32>
    %81 = vector.extract_strided_slice %79 {offsets = [0, 256], sizes = [16, 256], strides = [1, 1]} : vector<16x512xf32> to vector<16x256xf32>
    %82 = arith.negf %80 : vector<16x256xf32>
    %83 = math.exp %82 : vector<16x256xf32>
    %cst_33 = arith.constant 1.000000e+00 : f32
    %84 = vector.broadcast %cst_33 : f32 to vector<16x256xf32>
    %85 = arith.addf %84, %83 : vector<16x256xf32>
    %86 = arith.divf %84, %85 : vector<16x256xf32>
    %87 = arith.mulf %80, %86 : vector<16x256xf32>
    %88 = arith.mulf %87, %81 : vector<16x256xf32>
    %c1_i32_34 = arith.constant 1 : i32
    %89 = tpu.memref_slice %arg16[%c1_i32_34] : memref<2x!tpu.dma_semaphore, #tpu.memory_space<semaphore_mem>> -> memref<1x!tpu.dma_semaphore, #tpu.memory_space<semaphore_mem>>
    %90 = tpu.memref_squeeze %89 : memref<1x!tpu.dma_semaphore, #tpu.memory_space<semaphore_mem>> -> memref<!tpu.dma_semaphore, #tpu.memory_space<semaphore_mem>>
    tpu.wait_dma2 semaphore(%90 : memref<!tpu.dma_semaphore, #tpu.memory_space<semaphore_mem>>) src(%arg12 : memref<256x64xbf16, #tpu.memory_space<any>>) dst(%arg15 : memref<256x64xbf16, #tpu.memory_space<vmem>>)
    %91 = arith.truncf %88 : vector<16x256xf32> to vector<16x256xbf16>
    %c0_35 = arith.constant 0 : index
    %c0_36 = arith.constant 0 : index
    %92 = vector.load %arg15[%c0_35, %c0_36] : memref<256x64xbf16, #tpu.memory_space<vmem>>, vector<256x64xbf16>
    %cst_37 = arith.constant dense<0.000000e+00> : vector<16x64xf32>
    %93 = tpu.matmul %91, %92, %cst_37 {dimension_numbers = #tpu.dot_dimension_numbers<[1], [0], [0], [1], [0, 0, 1, 1], [], []>} : vector<16x256xbf16>, vector<256x64xbf16>, vector<16x64xf32> -> vector<16x64xf32>
    %94 = arith.addf %61, %93 : vector<16x64xf32>
    %c0_38 = arith.constant 0 : index
    %c0_39 = arith.constant 0 : index
    %95 = vector.load %arg13[%c0_38, %c0_39] : memref<16x64xf32, #tpu.memory_space<vmem>>, vector<16x64xf32>
    tpu.vector_store %arg13[%c0_38, %c0_39], %94 {strides = array<i32>} : memref<16x64xf32, #tpu.memory_space<vmem>>, vector<16x64xf32>,
    return
  }
  func.func @transform_0(%arg0: i32) -> (i32, i32) {
    %c0_i32 = arith.constant 0 : i32
    %c0_i32_0 = arith.constant 0 : i32
    %c0_i32_1 = arith.constant 0 : i32
    return %c0_i32, %c0_i32_0 : i32, i32
  }
  func.func @transform_1(%arg0: i32) -> (i32, i32) {
    %c0_i32 = arith.constant 0 : i32
    %c0_i32_0 = arith.constant 0 : i32
    %c0_i32_1 = arith.constant 0 : i32
    return %c0_i32, %c0_i32_0 : i32, i32
  }
  func.func @transform_2(%arg0: i32) -> (i32, i32) {
    %c0_i32 = arith.constant 0 : i32
    %c0_i32_0 = arith.constant 0 : i32
    %c0_i32_1 = arith.constant 0 : i32
    return %c0_i32, %c0_i32_0 : i32, i32
  }
  func.func @transform_3(%arg0: i32) -> (i32, i32) {
    %c0_i32 = arith.constant 0 : i32
    %c0_i32_0 = arith.constant 0 : i32
    %c0_i32_1 = arith.constant 0 : i32
    return %c0_i32, %c0_i32_0 : i32, i32
  }
  func.func @transform_4(%arg0: i32) -> (i32, i32) {
    %c0_i32 = arith.constant 0 : i32
    %c0_i32_0 = arith.constant 0 : i32
    %c0_i32_1 = arith.constant 0 : i32
    return %c0_i32, %c0_i32_0 : i32, i32
  }
  func.func @transform_5(%arg0: i32) -> (i32, i32) {
    %c0_i32 = arith.constant 0 : i32
    %c0_i32_0 = arith.constant 0 : i32
    %c0_i32_1 = arith.constant 0 : i32
    return %c0_i32, %c0_i32_0 : i32, i32
  }
  func.func @transform_6(%arg0: i32) -> (i32, i32) {
    %c0_i32 = arith.constant 0 : i32
    %c0_i32_0 = arith.constant 0 : i32
    %c0_i32_1 = arith.constant 0 : i32
    return %c0_i32, %c0_i32_0 : i32, i32
  }
  func.func @transform_7(%arg0: i32) -> (i32, i32) {
    %c0_i32 = arith.constant 0 : i32
    %c0_i32_0 = arith.constant 0 : i32
    %c0_i32_1 = arith.constant 0 : i32
    return %c0_i32, %c0_i32_0 : i32, i32
  }
  func.func @transform_8(%arg0: i32) -> (i32, i32) {
    %c0_i32 = arith.constant 0 : i32
    %c0_i32_0 = arith.constant 0 : i32
    %c0_i32_1 = arith.constant 0 : i32
    return %c0_i32, %c0_i32_0 : i32, i32
  }
  func.func @transform_9(%arg0: i32) -> (i32, i32) {
    %c0_i32 = arith.constant 0 : i32
    %c0_i32_0 = arith.constant 0 : i32
    %c0_i32_1 = arith.constant 0 : i32
    return %c0_i32, %c0_i32_0 : i32, i32
  }
  func.func @transform_12(%arg0: i32) -> (i32, i32) {
    %c0_i32 = arith.constant 0 : i32
    %c0_i32_0 = arith.constant 0 : i32
    %c0_i32_1 = arith.constant 0 : i32
    return %c0_i32, %c0_i32_0 : i32, i32
  }
}

</mosaic_0001>

<llo_original>
// kernel: decoder_layer.1
$region0: #{decoder_layer.1}
  #allocation0 [shape = 'u32[]', space=smem, size = 0x4, offset = 0x4, fixed_abs, tag = 'smem constant byte address 0x4 - core index']
  #allocation1 [shape = 'u32[144,128]{1,0:T(1,128)}', space=vmem, size = 0x12000, scoped, tag = 'internal scratch']
  #allocation2 [shape = 'bf16[64,512]{1,0:T(8,128)(2,1)}', space=vmem, size = 0x10000, scoped, tag = 'scratch operand']
  #allocation3 [shape = 'bf16[256,64]{1,0:T(8,128)(2,1)}', space=vmem, size = 0x10000, scoped, tag = 'scratch operand']
  #allocation4 [shape = 's32[2]{0}', space=sflag, size = 0x8, scoped, tag = 'scratch operand']
  #allocation17 [shape = 's32[]', space=sflag, size = 0x4, offset = 0, fixed_abs, tag = 'sflag constant byte address 0x0 - dummy sync flag']
  #allocation18 [shape = 's32[]', space=sflag, size = 0x4, offset = 0, fixed_abs, tag = 'sflag constant byte address 0x0 - dummy sync flag']
  %s0 = inlined_call_operand.vmem [shape: f32[16,64], index: 0, kind: input, shape index: {}]
  %s1 = inlined_call_operand.hbm [shape: f32[16,64], index: 1, kind: input, shape index: {}]
  %s2 = inlined_call_operand.hbm [shape: f32[16,64], index: 2, kind: input, shape index: {}]
  %s3 = inlined_call_operand.hbm [shape: f32[16,64], index: 3, kind: input, shape index: {}]
  %s4 = inlined_call_operand.vmem [shape: f32[64,64], index: 4, kind: input, shape index: {}]
  %s5 = inlined_call_operand.hbm [shape: f32[64,64], index: 5, kind: input, shape index: {}]
  %s6 = inlined_call_operand.vmem [shape: f32[1,64], index: 6, kind: input, shape index: {}]
  %s7 = inlined_call_operand.hbm [shape: bf16[64,320], index: 7, kind: input, shape index: {}]
  %s8 = inlined_call_operand.hbm [shape: bf16[64,64], index: 8, kind: input, shape index: {}]
  %s9 = inlined_call_operand.vmem [shape: f32[1,64], index: 9, kind: input, shape index: {}]
  %s10 = inlined_call_operand.vmem [shape: bf16[64,512], index: 10, kind: input, shape index: {}]
  %s11 = inlined_call_operand.vmem [shape: bf16[256,64], index: 11, kind: input, shape index: {}]
  %s12 = inlined_call_operand.hbm [shape: f32[16,64], index: 12, kind: output, shape index: {}]
  %s13 = sld [smem:[#allocation0]]
  $region142: #{decoder_layer.1} parent=0
    _
  %s15 = ssub.s32 1, %s13
  %s16 = scalar_select 0, %s15, %s13
  $region1: #{decoder_layer.1} parent=0
    #allocation5 [shape = 'u8[8192]{0}', space=vmem, size = 0x2000, scoped, tag = 'input window, operand 1, single buffered']
    #allocation6 [shape = 's32[1]{0}', space=sflag, size = 0x4, scoped, tag = 'scoped memory for decoder_layer.1']
    #allocation7 [shape = 's32[1]{0}', space=sflag, size = 0x4, scoped, tag = 'scoped memory for decoder_layer.1']
    #allocation8 [shape = 'u8[8192]{0}', space=vmem, size = 0x2000, scoped, tag = 'input window, operand 2, single buffered']
    #allocation9 [shape = 's32[1]{0}', space=sflag, size = 0x4, scoped, tag = 'scoped memory for decoder_layer.1']
    #allocation10 [shape = 'u8[8192]{0}', space=vmem, size = 0x2000, scoped, tag = 'input window, operand 3, single buffered']
    #allocation11 [shape = 'u8[32768]{0}', space=vmem, size = 0x8000, scoped, tag = 'input window, operand 5, single buffered']
    #allocation12 [shape = 's32[1]{0}', space=sflag, size = 0x4, scoped, tag = 'scoped memory for decoder_layer.1']
    #allocation13 [shape = 'u8[49152]{0}', space=vmem, size = 0xc000, scoped, tag = 'input window, operand 7, single buffered']
    #allocation14 [shape = 'u8[16384]{0}', space=vmem, size = 0x4000, scoped, tag = 'input window, operand 8, single buffered']
    #allocation15 [shape = 's32[1]{0}', space=sflag, size = 0x4, scoped, tag = 'scoped memory for decoder_layer.1']
    #allocation16 [shape = 'u8[8192]{0}', space=vmem, size = 0x2000, scoped, tag = 'output window, operand 0, single buffered']
    %17 = vsyncpa [#allocation6], 0
    %18 = vsyncpa [#allocation9], 0
    %19 = vsyncpa [#allocation12], 0
    %20 = vsyncpa [#allocation15], 0
    %21 = vsyncpa [#allocation7], 0
    // Predicated region
    $region2: #{decoder_layer.1} parent=1 // pred_check
      _
    $region3: #{decoder_layer.1} parent=1 // pred_check_branch
      %23 = sbr.rel (0) target = $region5
    $region4: #{decoder_layer.1} parent=1 // pred_region
      _
    $region5: #{decoder_layer.1} parent=1 // pred_fallthru
      _
    // Predicated region
    $region6: #{decoder_layer.1} parent=1 // pred_check
      _
    $region7: #{decoder_layer.1} parent=1 // pred_check_branch
      %25 = sbr.rel (0) target = $region9
    $region8: #{decoder_layer.1} parent=1 // pred_region
      %s27 = ssub.s32 256, 256
      %28 = vsyncadd [#allocation6], %s27
      %s29 = sshll.u32 [#allocation5], 4
      %s30 = int_to_ptr.vmem [resolvable:$true] %s29
      %35 = dma.hbm_to_vmem [thread:$0]  %s1, 256, %s30, [#allocation6], 128, 128, 8
    $region9: #{decoder_layer.1} parent=1 // pred_fallthru
      _
    // Predicated region
    $region10: #{decoder_layer.1} parent=1 // pred_check
      _
    $region11: #{decoder_layer.1} parent=1 // pred_check_branch
      %37 = sbr.rel (0) target = $region13
    $region12: #{decoder_layer.1} parent=1 // pred_region
      %s39 = ssub.s32 256, 256
      %40 = vsyncadd [#allocation9], %s39
      %s41 = sshll.u32 [#allocation8], 4
      %s42 = int_to_ptr.vmem [resolvable:$true] %s41
      %47 = dma.hbm_to_vmem [thread:$0]  %s2, 256, %s42, [#allocation9], 128, 128, 8
    $region13: #{decoder_layer.1} parent=1 // pred_fallthru
      _
    // Predicated region
    $region14: #{decoder_layer.1} parent=1 // pred_check
      _
    $region15: #{decoder_layer.1} parent=1 // pred_check_branch
      %49 = sbr.rel (0) target = $region17
    $region16: #{decoder_layer.1} parent=1 // pred_region
      %s51 = ssub.s32 256, 256
      %52 = vsyncadd [#allocation9], %s51
      %s53 = sshll.u32 [#allocation10], 4
      %s54 = int_to_ptr.vmem [resolvable:$true] %s53
      %59 = dma.hbm_to_vmem [thread:$0]  %s3, 256, %s54, [#allocation9], 128, 128, 8
    $region17: #{decoder_layer.1} parent=1 // pred_fallthru
      _
    // Predicated region
    $region18: #{decoder_layer.1} parent=1 // pred_check
      _
    $region19: #{decoder_layer.1} parent=1 // pred_check_branch
      %61 = sbr.rel (0) target = $region21
    $region20: #{decoder_layer.1} parent=1 // pred_region
      _
    $region21: #{decoder_layer.1} parent=1 // pred_fallthru
      _
    // Predicated region
    $region22: #{decoder_layer.1} parent=1 // pred_check
      _
    $region23: #{decoder_layer.1} parent=1 // pred_check_branch
      %63 = sbr.rel (0) target = $region25
    $region24: #{decoder_layer.1} parent=1 // pred_region
      %s65 = ssub.s32 1024, 1024
      %66 = vsyncadd [#allocation12], %s65
      %s67 = sshll.u32 [#allocation11], 4
      %s68 = int_to_ptr.vmem [resolvable:$true] %s67
      %73 = dma.hbm_to_vmem [thread:$0]  %s5, 1024, %s68, [#allocation12], 128, 128, 8
    $region25: #{decoder_layer.1} parent=1 // pred_fallthru
      _
    // Predicated region
    $region26: #{decoder_layer.1} parent=1 // pred_check
      _
    $region27: #{decoder_layer.1} parent=1 // pred_check_branch
      %75 = sbr.rel (0) target = $region29
    $region28: #{decoder_layer.1} parent=1 // pred_region
      _
    $region29: #{decoder_layer.1} parent=1 // pred_fallthru
      _
    // Predicated region
    $region30: #{decoder_layer.1} parent=1 // pred_check
      _
    $region31: #{decoder_layer.1} parent=1 // pred_check_branch
      %77 = sbr.rel (0) target = $region33
    $region32: #{decoder_layer.1} parent=1 // pred_region
      %s79 = ssub.s32 1536, 1536
      %80 = vsyncadd [#allocation12], %s79
      %s81 = sshll.u32 [#allocation13], 4
      %s82 = int_to_ptr.vmem [resolvable:$true] %s81
      %87 = dma.hbm_to_vmem [thread:$0]  %s7, 1536, %s82, [#allocation12], 192, 192, 12
    $region33: #{decoder_layer.1} parent=1 // pred_fallthru
      _
    // Predicated region
    $region34: #{decoder_layer.1} parent=1 // pred_check
      _
    $region35: #{decoder_layer.1} parent=1 // pred_check_branch
      %89 = sbr.rel (0) target = $region37
    $region36: #{decoder_layer.1} parent=1 // pred_region
      %s91 = ssub.s32 512, 512
      %92 = vsyncadd [#allocation15], %s91
      %s93 = sshll.u32 [#allocation14], 4
      %s94 = int_to_ptr.vmem [resolvable:$true] %s93
      %99 = dma.hbm_to_vmem [thread:$0]  %s8, 512, %s94, [#allocation15], 64, 64, 4
    $region37: #{decoder_layer.1} parent=1 // pred_fallthru
      _
    // Predicated region
    $region38: #{decoder_layer.1} parent=1 // pred_check
      _
    $region39: #{decoder_layer.1} parent=1 // pred_check_branch
      %101 = sbr.rel (0) target = $region41
    $region40: #{decoder_layer.1} parent=1 // pred_region
      _
    $region41: #{decoder_layer.1} parent=1 // pred_fallthru
      _
    // Predicated region
    $region42: #{decoder_layer.1} parent=1 // pred_check
      _
    $region43: #{decoder_layer.1} parent=1 // pred_check_branch
      %103 = sbr.rel (0) target = $region45
    $region44: #{decoder_layer.1} parent=1 // pred_region
      %104 = dma.done [#allocation6], 256
    $region45: #{decoder_layer.1} parent=1 // pred_fallthru
      _
    // Predicated region
    $region46: #{decoder_layer.1} parent=1 // pred_check
      _
    $region47: #{decoder_layer.1} parent=1 // pred_check_branch
      %106 = sbr.rel (0) target = $region49
    $region48: #{decoder_layer.1} parent=1 // pred_region
      %107 = dma.done [#allocation9], 256
    $region49: #{decoder_layer.1} parent=1 // pred_fallthru
      _
    // Predicated region
    $region50: #{decoder_layer.1} parent=1 // pred_check
      _
    $region51: #{decoder_layer.1} parent=1 // pred_check_branch
      %109 = sbr.rel (0) target = $region53
    $region52: #{decoder_layer.1} parent=1 // pred_region
      %110 = dma.done [#allocation9], 256
    $region53: #{decoder_layer.1} parent=1 // pred_fallthru
      _
    // Predicated region
    $region54: #{decoder_layer.1} parent=1 // pred_check
      _
    $region55: #{decoder_layer.1} parent=1 // pred_check_branch
      %112 = sbr.rel (0) target = $region57
    $region56: #{decoder_layer.1} parent=1 // pred_region
      %113 = dma.done [#allocation12], 1024
    $region57: #{decoder_layer.1} parent=1 // pred_fallthru
      _
    // Predicated region
    $region58: #{decoder_layer.1} parent=1 // pred_check
      _
    $region59: #{decoder_layer.1} parent=1 // pred_check_branch
      %115 = sbr.rel (0) target = $region61
    $region60: #{decoder_layer.1} parent=1 // pred_region
      %116 = dma.done [#allocation12], 1536
    $region61: #{decoder_layer.1} parent=1 // pred_fallthru
      _
    // Predicated region
    $region62: #{decoder_layer.1} parent=1 // pred_check
      _
    $region63: #{decoder_layer.1} parent=1 // pred_check_branch
      %118 = sbr.rel (0) target = $region65
    $region64: #{decoder_layer.1} parent=1 // pred_region
      %119 = dma.done [#allocation15], 512
    $region65: #{decoder_layer.1} parent=1 // pred_fallthru
      _
    %p122 = scmp.lt.u32.totalorder 128, 8
    %p123 = pneg %p122
    // Predicated region
    $region66: #{decoder_layer.1} parent=1 // pred_check
      _
    $region67: #{decoder_layer.1} parent=1 // pred_check_branch
      %125 = sbr.rel (%p122) target = $region69
    $region68: #{decoder_layer.1} parent=1 // pred_region
      %s141 = sand.u32 128, 7
      %p142 = scmp.eq.s32.totalorder %s141, 0
      // Predicated region
      $region81: #{decoder_layer.1} parent=68 // pred_check
        %p143 = pneg %p142
      $region82: #{decoder_layer.1} parent=68 // pred_check_branch
        %145 = sbr.rel (%p143) target = $region84
      $region83: #{decoder_layer.1} parent=68 // pred_region
        loop: start=0, step=1, limit=1
        $region85: #{decoder_layer.1} parent=83 // loop_pre_header
          _
        $region86: #{decoder_layer.1} parent=83 // loop_header
          %s147 = sphi 0, %s151
          %p148 = scmp.ge.s32.totalorder %s147, 1
          %s152 = sphi %s10, %s10
          %s153 = sphi [#allocation2], [#allocation2]
        $region87: #{decoder_layer.1} parent=83 // loop_header_branch
          %150 = sbr.rel (%p148) target = $region91
        $region88: #{decoder_layer.1} parent=83 // loop_body
          %v154 = vld [vmem:[%s152] sm:$0xff]
          %155 = vst [vmem:[%s153] sm:$0xff] %v154
          %v156 = vld [vmem:[%s152 + $0x8] sm:$0xff]
          %157 = vst [vmem:[%s153 + $0x8] sm:$0xff] %v156
          %v158 = vld [vmem:[%s152 + $0x10] sm:$0xff]
          %159 = vst [vmem:[%s153 + $0x10] sm:$0xff] %v158
          %v160 = vld [vmem:[%s152 + $0x18] sm:$0xff]
          %161 = vst [vmem:[%s153 + $0x18] sm:$0xff] %v160
          %v162 = vld [vmem:[%s152 + $0x20] sm:$0xff]
          %163 = vst [vmem:[%s153 + $0x20] sm:$0xff] %v162
          %v164 = vld [vmem:[%s152 + $0x28] sm:$0xff]
          %165 = vst [vmem:[%s153 + $0x28] sm:$0xff] %v164
          %v166 = vld [vmem:[%s152 + $0x30] sm:$0xff]
          %167 = vst [vmem:[%s153 + $0x30] sm:$0xff] %v166
          %v168 = vld [vmem:[%s152 + $0x38] sm:$0xff]
          %169 = vst [vmem:[%s153 + $0x38] sm:$0xff] %v168
          %v170 = vld [vmem:[%s152 + $0x40] sm:$0xff]
          %171 = vst [vmem:[%s153 + $0x40] sm:$0xff] %v170
          %v172 = vld [vmem:[%s152 + $0x48] sm:$0xff]
          %173 = vst [vmem:[%s153 + $0x48] sm:$0xff] %v172
          %v174 = vld [vmem:[%s152 + $0x50] sm:$0xff]
          %175 = vst [vmem:[%s153 + $0x50] sm:$0xff] %v174
          %v176 = vld [vmem:[%s152 + $0x58] sm:$0xff]
          %177 = vst [vmem:[%s153 + $0x58] sm:$0xff] %v176
          %v178 = vld [vmem:[%s152 + $0x60] sm:$0xff]
          %179 = vst [vmem:[%s153 + $0x60] sm:$0xff] %v178
          %v180 = vld [vmem:[%s152 + $0x68] sm:$0xff]
          %181 = vst [vmem:[%s153 + $0x68] sm:$0xff] %v180
          %v182 = vld [vmem:[%s152 + $0x70] sm:$0xff]
          %183 = vst [vmem:[%s153 + $0x70] sm:$0xff] %v182
          %v184 = vld [vmem:[%s152 + $0x78] sm:$0xff]
          %185 = vst [vmem:[%s153 + $0x78] sm:$0xff] %v184
        $region89: #{decoder_layer.1} parent=83 // loop_footer
          %s151 = sadd.s32 1, %s147
        $region90: #{decoder_layer.1} parent=83 // loop_footer_branch
          %146 = sbr.rel target = $region86
        $region91: #{decoder_layer.1} parent=83 // loop_exit
          _
      $region84: #{decoder_layer.1} parent=68 // pred_fallthru
        _
      %p186 = pneg %p142
      // Predicated region
      $region92: #{decoder_layer.1} parent=68 // pred_check
        _
      $region93: #{decoder_layer.1} parent=68 // pred_check_branch
        %188 = sbr.rel (%p142) target = $region95
      $region94: #{decoder_layer.1} parent=68 // pred_region
        %s189 = sand.u32 128, 7
      $region95: #{decoder_layer.1} parent=68 // pred_fallthru
        _
    $region69: #{decoder_layer.1} parent=1 // pred_fallthru
      _
    // Predicated region
    $region70: #{decoder_layer.1} parent=1 // pred_check
      %p126 = pneg %p122
    $region71: #{decoder_layer.1} parent=1 // pred_check_branch
      %128 = sbr.rel (%p126) target = $region73
    $region72: #{decoder_layer.1} parent=1 // pred_region
      %s129 = sshll.u32 1, 128
      %s130 = ssub.s32 %s129, 1
      loop: start=0, step=1, limit=1
      $region74: #{decoder_layer.1} parent=72 // loop_pre_header
        _
      $region75: #{decoder_layer.1} parent=72 // loop_header
        %s132 = sphi 0, %s136
        %p133 = scmp.ge.s32.totalorder %s132, 1
        %s137 = sphi %s10, %s10
        %s138 = sphi [#allocation2], [#allocation2]
      $region76: #{decoder_layer.1} parent=72 // loop_header_branch
        %135 = sbr.rel (%p133) target = $region80
      $region77: #{decoder_layer.1} parent=72 // loop_body
        %v139 = vld [vmem:[%s137] sm:%s130]
        %140 = vst [vmem:[%s138] sm:%s130] %v139
      $region78: #{decoder_layer.1} parent=72 // loop_footer
        %s136 = sadd.s32 1, %s132
      $region79: #{decoder_layer.1} parent=72 // loop_footer_branch
        %131 = sbr.rel target = $region75
      $region80: #{decoder_layer.1} parent=72 // loop_exit
        _
    $region73: #{decoder_layer.1} parent=1 // pred_fallthru
      _
    // Predicated region
    $region96: #{decoder_layer.1} parent=1 // pred_check
      _
    $region97: #{decoder_layer.1} parent=1 // pred_check_branch
      %192 = sbr.rel (0) target = $region99
    $region98: #{decoder_layer.1} parent=1 // pred_region
      %193 = vsyncadd [#allocation4], 2048
    $region99: #{decoder_layer.1} parent=1 // pred_fallthru
      _
    %s194 = scalar_lea.sflag [#allocation4], 1
    %p196 = scmp.lt.u32.totalorder 128, 8
    %p197 = pneg %p196
    // Predicated region
    $region100: #{decoder_layer.1} parent=1 // pred_check
      _
    $region101: #{decoder_layer.1} parent=1 // pred_check_branch
      %199 = sbr.rel (%p196) target = $region103
    $region102: #{decoder_layer.1} parent=1 // pred_region
      %s215 = sand.u32 128, 7
      %p216 = scmp.eq.s32.totalorder %s215, 0
      // Predicated region
      $region115: #{decoder_layer.1} parent=102 // pred_check
        %p217 = pneg %p216
      $region116: #{decoder_layer.1} parent=102 // pred_check_branch
        %219 = sbr.rel (%p217) target = $region118
      $region117: #{decoder_layer.1} parent=102 // pred_region
        loop: start=0, step=1, limit=1
        $region119: #{decoder_layer.1} parent=117 // loop_pre_header
          _
        $region120: #{decoder_layer.1} parent=117 // loop_header
          %s221 = sphi 0, %s225
          %p222 = scmp.ge.s32.totalorder %s221, 1
          %s226 = sphi %s11, %s11
          %s227 = sphi [#allocation3], [#allocation3]
        $region121: #{decoder_layer.1} parent=117 // loop_header_branch
          %224 = sbr.rel (%p222) target = $region125
        $region122: #{decoder_layer.1} parent=117 // loop_body
          %v228 = vld [vmem:[%s226] sm:$0xff]
          %229 = vst [vmem:[%s227] sm:$0xff] %v228
          %v230 = vld [vmem:[%s226 + $0x8] sm:$0xff]
          %231 = vst [vmem:[%s227 + $0x8] sm:$0xff] %v230
          %v232 = vld [vmem:[%s226 + $0x10] sm:$0xff]
          %233 = vst [vmem:[%s227 + $0x10] sm:$0xff] %v232
          %v234 = vld [vmem:[%s226 + $0x18] sm:$0xff]
          %235 = vst [vmem:[%s227 + $0x18] sm:$0xff] %v234
          %v236 = vld [vmem:[%s226 + $0x20] sm:$0xff]
          %237 = vst [vmem:[%s227 + $0x20] sm:$0xff] %v236
          %v238 = vld [vmem:[%s226 + $0x28] sm:$0xff]
          %239 = vst [vmem:[%s227 + $0x28] sm:$0xff] %v238
          %v240 = vld [vmem:[%s226 + $0x30] sm:$0xff]
          %241 = vst [vmem:[%s227 + $0x30] sm:$0xff] %v240
          %v242 = vld [vmem:[%s226 + $0x38] sm:$0xff]
          %243 = vst [vmem:[%s227 + $0x38] sm:$0xff] %v242
          %v244 = vld [vmem:[%s226 + $0x40] sm:$0xff]
          %245 = vst [vmem:[%s227 + $0x40] sm:$0xff] %v244
          %v246 = vld [vmem:[%s226 + $0x48] sm:$0xff]
          %247 = vst [vmem:[%s227 + $0x48] sm:$0xff] %v246
          %v248 = vld [vmem:[%s226 + $0x50] sm:$0xff]
          %249 = vst [vmem:[%s227 + $0x50] sm:$0xff] %v248
          %v250 = vld [vmem:[%s226 + $0x58] sm:$0xff]
          %251 = vst [vmem:[%s227 + $0x58] sm:$0xff] %v250
          %v252 = vld [vmem:[%s226 + $0x60] sm:$0xff]
          %253 = vst [vmem:[%s227 + $0x60] sm:$0xff] %v252
          %v254 = vld [vmem:[%s226 + $0x68] sm:$0xff]
          %255 = vst [vmem:[%s227 + $0x68] sm:$0xff] %v254
          %v256 = vld [vmem:[%s226 + $0x70] sm:$0xff]
          %257 = vst [vmem:[%s227 + $0x70] sm:$0xff] %v256
          %v258 = vld [vmem:[%s226 + $0x78] sm:$0xff]
          %259 = vst [vmem:[%s227 + $0x78] sm:$0xff] %v258
        $region123: #{decoder_layer.1} parent=117 // loop_footer
          %s225 = sadd.s32 1, %s221
        $region124: #{decoder_layer.1} parent=117 // loop_footer_branch
          %220 = sbr.rel target = $region120
        $region125: #{decoder_layer.1} parent=117 // loop_exit
          _
      $region118: #{decoder_layer.1} parent=102 // pred_fallthru
        _
      %p260 = pneg %p216
      // Predicated region
      $region126: #{decoder_layer.1} parent=102 // pred_check
        _
      $region127: #{decoder_layer.1} parent=102 // pred_check_branch
        %262 = sbr.rel (%p216) target = $region129
      $region128: #{decoder_layer.1} parent=102 // pred_region
        %s263 = sand.u32 128, 7
      $region129: #{decoder_layer.1} parent=102 // pred_fallthru
        _
    $region103: #{decoder_layer.1} parent=1 // pred_fallthru
      _
    // Predicated region
    $region104: #{decoder_layer.1} parent=1 // pred_check
      %p200 = pneg %p196
    $region105: #{decoder_layer.1} parent=1 // pred_check_branch
      %202 = sbr.rel (%p200) target = $region107
    $region106: #{decoder_layer.1} parent=1 // pred_region
      %s203 = sshll.u32 1, 128
      %s204 = ssub.s32 %s203, 1
      loop: start=0, step=1, limit=1
      $region108: #{decoder_layer.1} parent=106 // loop_pre_header
        _
      $region109: #{decoder_layer.1} parent=106 // loop_header
        %s206 = sphi 0, %s210
        %p207 = scmp.ge.s32.totalorder %s206, 1
        %s211 = sphi %s11, %s11
        %s212 = sphi [#allocation3], [#allocation3]
      $region110: #{decoder_layer.1} parent=106 // loop_header_branch
        %209 = sbr.rel (%p207) target = $region114
      $region111: #{decoder_layer.1} parent=106 // loop_body
        %v213 = vld [vmem:[%s211] sm:%s204]
        %214 = vst [vmem:[%s212] sm:%s204] %v213
      $region112: #{decoder_layer.1} parent=106 // loop_footer
        %s210 = sadd.s32 1, %s206
      $region113: #{decoder_layer.1} parent=106 // loop_footer_branch
        %205 = sbr.rel target = $region109
      $region114: #{decoder_layer.1} parent=106 // loop_exit
        _
    $region107: #{decoder_layer.1} parent=1 // pred_fallthru
      _
    // Predicated region
    $region130: #{decoder_layer.1} parent=1 // pred_check
      _
    $region131: #{decoder_layer.1} parent=1 // pred_check_branch
      %266 = sbr.rel (0) target = $region133
    $region132: #{decoder_layer.1} parent=1 // pred_region
      %267 = vsyncadd %s194, 2048
    $region133: #{decoder_layer.1} parent=1 // pred_fallthru
      _
    %v268 = vld [vmem:[%s0] sm:$0xff]
    %v269 = vld [vmem:[%s0 + $0x8] sm:$0xff]
    %v270 = vld [vmem:[#allocation5] sm:$0xff]
    %v271 = vld [vmem:[#allocation5 + $0x8] sm:$0xff]
    %v272 = vld [vmem:[#allocation8] sm:$0xff]
    %v273 = vld [vmem:[#allocation8 + $0x8] sm:$0xff]
    %v274 = vld [vmem:[#allocation10] sm:$0xff]
    %v275 = vld [vmem:[#allocation10 + $0x8] sm:$0xff]
    %v276 = vld [vmem:[%s4] sm:$0xff]
    %v277 = vld [vmem:[%s4 + $0x8] sm:$0xff]
    %v278 = vld [vmem:[%s4 + $0x10] sm:$0xff]
    %v279 = vld [vmem:[%s4 + $0x18] sm:$0xff]
    %v280 = vld [vmem:[%s4 + $0x20] sm:$0xff]
    %v281 = vld [vmem:[%s4 + $0x28] sm:$0xff]
    %v282 = vld [vmem:[%s4 + $0x30] sm:$0xff]
    %v283 = vld [vmem:[%s4 + $0x38] sm:$0xff]
    %v284 = vld [vmem:[#allocation11] sm:$0xff]
    %v285 = vld [vmem:[#allocation11 + $0x8] sm:$0xff]
    %v286 = vld [vmem:[#allocation11 + $0x10] sm:$0xff]
    %v287 = vld [vmem:[#allocation11 + $0x18] sm:$0xff]
    %v288 = vld [vmem:[#allocation11 + $0x20] sm:$0xff]
    %v289 = vld [vmem:[#allocation11 + $0x28] sm:$0xff]
    %v290 = vld [vmem:[#allocation11 + $0x30] sm:$0xff]
    %v291 = vld [vmem:[#allocation11 + $0x38] sm:$0xff]
    %v292 = vld [vmem:[%s6] sm:$0x1]
    %v293 = vmul.f32 %v268, %v268
    %v294 = vmul.f32 %v269, %v269
    %vm295 = vcmask 523264
    %v296 = vsel %vm295, %v293, 0.0
    %297 = vadd.xlane.f32.xlu0 %v296
    %v298 = vpop.xlane.xlu0 %297
    %v299 = vsel %vm295, %v294, 0.0
    %300 = vadd.xlane.f32.xlu0 %v299
    %v301 = vpop.xlane.xlu0 %300
    %v302 = vrcp.pop 64.0
    %v303 = vmul.f32 %v298, %v302
    %v304 = vmul.f32 %v301, %v302
    %v305 = vadd.f32 %v303, 1e-05
    %v306 = vadd.f32 %v304, 1e-05
    %v307 = vrsqrt.pop %v305
    %v308 = vrsqrt.pop %v306
    %v309 = vmul.f32 %v268, %v307
    %v310 = vmul.f32 %v269, %v308
    %v312 = vlaneseq
    %v313 = vshrl.u32 %v312, 7
    %v314 = vsub.s32 0, %v313
    %v315 = vrot.slane %v292, %v314
    %v317 = vmul.f32 %v315, %v309
    %v318 = vmul.f32 %v315, %v310
    %v319 = vpack.c.bf16 %v318, %v317
    %v320 = vld [vmem:[#allocation13] sm:$0xff]
    %v321 = vld [vmem:[#allocation13 + $0x8] sm:$0xf]
    %v322 = vld [vmem:[#allocation13 + $0xc] sm:$0xff]
    %v323 = vld [vmem:[#allocation13 + $0x14] sm:$0xf]
    %v324 = vld [vmem:[#allocation13 + $0x18] sm:$0xff]
    %v325 = vld [vmem:[#allocation13 + $0x20] sm:$0xf]
    %v326 = vld [vmem:[#allocation13 + $0x24] sm:$0xff]
    %v327 = vld [vmem:[#allocation13 + $0x2c] sm:$0xf]
    %v328 = vld [vmem:[#allocation13 + $0x30] sm:$0xff]
    %v329 = vld [vmem:[#allocation13 + $0x38] sm:$0xf]
    %v330 = vld [vmem:[#allocation13 + $0x3c] sm:$0xff]
    %v331 = vld [vmem:[#allocation13 + $0x44] sm:$0xf]
    %v332 = vld [vmem:[#allocation13 + $0x48] sm:$0xff]
    %v333 = vld [vmem:[#allocation13 + $0x50] sm:$0xf]
    %v334 = vld [vmem:[#allocation13 + $0x54] sm:$0xff]
    %v335 = vld [vmem:[#allocation13 + $0x5c] sm:$0xf]
    %v352 = vunpack.c.l.b16 %v320
    %v353 = vunpack.c.h.b16 %v320
    %v354 = vunpack.c.l.b16 %v321
    %v355 = vunpack.c.l.b16 %v322
    %v356 = vunpack.c.h.b16 %v322
    %v357 = vunpack.c.l.b16 %v323
    %v358 = vunpack.c.l.b16 %v324
    %v359 = vunpack.c.h.b16 %v324
    %v360 = vunpack.c.l.b16 %v325
    %v361 = vunpack.c.l.b16 %v326
    %v362 = vunpack.c.h.b16 %v326
    %v363 = vunpack.c.l.b16 %v327
    %v364 = vunpack.c.l.b16 %v328
    %v365 = vunpack.c.h.b16 %v328
    %v366 = vunpack.c.l.b16 %v329
    %v367 = vunpack.c.l.b16 %v330
    %v368 = vunpack.c.h.b16 %v330
    %v369 = vunpack.c.l.b16 %v331
    %v370 = vunpack.c.l.b16 %v332
    %v371 = vunpack.c.h.b16 %v332
    %v372 = vunpack.c.l.b16 %v333
    %v373 = vunpack.c.l.b16 %v334
    %v374 = vunpack.c.h.b16 %v334
    %v375 = vunpack.c.l.b16 %v335
    %v376 = vpack.c.b16 %v355, %v352
    %v377 = vpack.c.b16 %v356, %v353
    %v378 = vpack.c.b16 %v357, %v354
    %v379 = vpack.c.b16 %v361, %v358
    %v380 = vpack.c.b16 %v362, %v359
    %v381 = vpack.c.b16 %v363, %v360
    %v382 = vpack.c.b16 %v367, %v364
    %v383 = vpack.c.b16 %v368, %v365
    %v384 = vpack.c.b16 %v369, %v366
    %v385 = vpack.c.b16 %v373, %v370
    %v386 = vpack.c.b16 %v374, %v371
    %v387 = vpack.c.b16 %v375, %v372
    %v401 = vsel %vm295, %v319, 0
    %403 = vmatprep.subr.bf16.mxu0 0
    %404 = vmatpush1.bf16.msra.mxu0 0
    %405 = vmatprep.subr.bf16.mxu0 0
    %406 = vmatpush1.bf16.msra.mxu0 0
    %407 = vmatprep.subr.bf16.mxu0 0
    %408 = vmatpush1.bf16.msra.mxu0 0
    %409 = vmatprep.subr.bf16.mxu0 0
    %410 = vmatpush1.bf16.msra.mxu0 0
    %411 = vmatprep.subr.bf16.mxu0 %v386
    %412 = vmatpush1.bf16.msra.mxu0 %v385
    %413 = vmatprep.subr.bf16.mxu0 %v383
    %414 = vmatpush1.bf16.msra.mxu0 %v382
    %415 = vmatprep.subr.bf16.mxu0 %v380
    %416 = vmatpush1.bf16.msra.mxu0 %v379
    %417 = vmatprep.subr.bf16.mxu0 %v377
    %418 = vmatpush1.bf16.msra.mxu0 %v376
    %419 = vmatprep.subr.bf16.mxu0 0
    %420 = vmatpush2.bf16.msra.mxu0 0
    %421 = vmatprep.subr.bf16.mxu0 0
    %422 = vmatpush2.bf16.msra.mxu0 0
    %423 = vmatprep.subr.bf16.mxu0 0
    %424 = vmatpush2.bf16.msra.mxu0 0
    %425 = vmatprep.subr.bf16.mxu0 0
    %426 = vmatpush2.bf16.msra.mxu0 0
    %427 = vmatprep.subr.bf16.mxu0 0
    %428 = vmatpush2.bf16.msra.mxu0 0
    %429 = vmatprep.subr.bf16.mxu0 0
    %430 = vmatpush2.bf16.msra.mxu0 0
    %431 = vmatprep.subr.bf16.mxu0 0
    %432 = vmatpush2.bf16.msra.mxu0 0
    %433 = vmatprep.subr.bf16.mxu0 0
    %434 = vmatpush2.bf16.msra.mxu0 0
    %435 = vmatprep.mubr.bf16.mxu0 0
    %436 = vmatmul.mubr.bf16.gmra.mxu0 %v401
    %v437 = vpop.f32.mrf.mxu0
    %v438 = vadd.f32 0.0, %v437
    %v439 = vpop.f32.mrf.mxu0
    %v440 = vadd.f32 0.0, %v439
    %v441 = vpop.f32.mrf.mxu0
    %v442 = vadd.f32 0.0, %v441
    %v443 = vpop.f32.mrf.mxu0
    %v444 = vadd.f32 0.0, %v443
    %445 = vdwg.mxu0
    %446 = vmatprep.subr.bf16.mxu0 0
    %447 = vmatpush1.bf16.msra.mxu0 0
    %448 = vmatprep.subr.bf16.mxu0 0
    %449 = vmatpush1.bf16.msra.mxu0 0
    %450 = vmatprep.subr.bf16.mxu0 0
    %451 = vmatpush1.bf16.msra.mxu0 0
    %452 = vmatprep.subr.bf16.mxu0 0
    %453 = vmatpush1.bf16.msra.mxu0 0
    %454 = vmatprep.subr.bf16.mxu0 0
    %455 = vmatpush1.bf16.msra.mxu0 %v387
    %456 = vmatprep.subr.bf16.mxu0 0
    %457 = vmatpush1.bf16.msra.mxu0 %v384
    %458 = vmatprep.subr.bf16.mxu0 0
    %459 = vmatpush1.bf16.msra.mxu0 %v381
    %460 = vmatprep.subr.bf16.mxu0 0
    %461 = vmatpush1.bf16.msra.mxu0 %v378
    %462 = vmatprep.subr.bf16.mxu0 0
    %463 = vmatpush2.bf16.msra.mxu0 0
    %464 = vmatprep.subr.bf16.mxu0 0
    %465 = vmatpush2.bf16.msra.mxu0 0
    %466 = vmatprep.subr.bf16.mxu0 0
    %467 = vmatpush2.bf16.msra.mxu0 0
    %468 = vmatprep.subr.bf16.mxu0 0
    %469 = vmatpush2.bf16.msra.mxu0 0
    %470 = vmatprep.subr.bf16.mxu0 0
    %471 = vmatpush2.bf16.msra.mxu0 0
    %472 = vmatprep.subr.bf16.mxu0 0
    %473 = vmatpush2.bf16.msra.mxu0 0
    %474 = vmatprep.subr.bf16.mxu0 0
    %475 = vmatpush2.bf16.msra.mxu0 0
    %476 = vmatprep.subr.bf16.mxu0 0
    %477 = vmatpush2.bf16.msra.mxu0 0
    %478 = vmatprep.mubr.bf16.mxu0 0
    %479 = vmatmul.mubr.bf16.gmra.mxu0 %v401
    %v480 = vpop.f32.mrf.mxu0
    %v481 = vadd.f32 0.0, %v480
    %v482 = vpop.f32.mrf.mxu0
    %v483 = vpop.f32.mrf.mxu0
    %v484 = vadd.f32 0.0, %v483
    %v485 = vpop.f32.mrf.mxu0
    %486 = vdwg.mxu0
    %v487 = vmul.f32 %v438, %v270
    %v488 = vmul.f32 %v442, %v271
    %491 = vrot.lane.b32.xlu0 %v272, 64
    %v492 = vpop.permute.xlu0 %491
    %493 = vrot.lane.b32.xlu0 %v273, 64
    %v494 = vpop.permute.xlu0 %493
    %v497 = vmul.f32 %v438, %v492
    %v498 = vmul.f32 %v442, %v494
    %501 = vrot.lane.b32.xlu0 %v497, 64
    %v502 = vpop.permute.xlu0 %501
    %503 = vrot.lane.b32.xlu0 %v498, 64
    %v504 = vpop.permute.xlu0 %503
    %v507 = vadd.f32 %v487, %v502
    %v508 = vadd.f32 %v488, %v504
    %v509 = vmul.f32 %v440, %v270
    %v510 = vmul.f32 %v444, %v271
    %v511 = vmul.f32 %v440, %v492
    %v512 = vmul.f32 %v444, %v494
    %515 = vrot.lane.b32.xlu0 %v511, 64
    %v516 = vpop.permute.xlu0 %515
    %517 = vrot.lane.b32.xlu0 %v512, 64
    %v518 = vpop.permute.xlu0 %517
    %v521 = vadd.f32 %v509, %v516
    %v522 = vadd.f32 %v510, %v518
    %v523 = vmul.f32 %v521, %v276
    %v524 = vmul.f32 %v522, %v277
    %v525 = vmul.f32 %v521, %v278
    %v526 = vmul.f32 %v522, %v279
    %v527 = vmul.f32 %v521, %v280
    %v528 = vmul.f32 %v522, %v281
    %v529 = vmul.f32 %v521, %v282
    %v530 = vmul.f32 %v522, %v283
    %v531 = vmul.f32 %v481, %v276
    %v532 = vmul.f32 %v484, %v277
    %v533 = vmul.f32 %v481, %v278
    %v534 = vmul.f32 %v484, %v279
    %v535 = vmul.f32 %v481, %v280
    %v536 = vmul.f32 %v484, %v281
    %v537 = vmul.f32 %v481, %v282
    %v538 = vmul.f32 %v484, %v283
    %v539 = vpack.c.bf16 %v508, %v507
    %v540 = vpack.c.bf16 %v524, %v523
    %v541 = vpack.c.bf16 %v526, %v525
    %v542 = vpack.c.bf16 %v528, %v527
    %v543 = vpack.c.bf16 %v530, %v529
    %v545 = vsel %vm295, %v539, 0
    %v548 = vsel %vm295, %v540, 0
    %v551 = vsel %vm295, %v541, 0
    %v554 = vsel %vm295, %v542, 0
    %v557 = vsel %vm295, %v543, 0
    %559 = vmatprep.subr.bf16.mxu0 0
    %560 = vmatpush1.bf16.xpose.msra.mxu0 0
    %561 = vmatprep.subr.bf16.mxu0 0
    %562 = vmatpush1.bf16.xpose.msra.mxu0 0
    %563 = vmatprep.subr.bf16.mxu0 0
    %564 = vmatpush1.bf16.xpose.msra.mxu0 0
    %565 = vmatprep.subr.bf16.mxu0 0
    %566 = vmatpush1.bf16.xpose.msra.mxu0 0
    %567 = vmatprep.subr.bf16.mxu0 0
    %568 = vmatpush1.bf16.xpose.msra.mxu0 %v557
    %569 = vmatprep.subr.bf16.mxu0 0
    %570 = vmatpush1.bf16.xpose.msra.mxu0 %v554
    %571 = vmatprep.subr.bf16.mxu0 0
    %572 = vmatpush1.bf16.xpose.msra.mxu0 %v551
    %573 = vmatprep.subr.bf16.mxu0 0
    %574 = vmatpush1.bf16.xpose.msra.mxu0 %v548
    %575 = vmatprep.subr.bf16.mxu0 0
    %576 = vmatpush2.bf16.xpose.msra.mxu0 0
    %577 = vmatprep.subr.bf16.mxu0 0
    %578 = vmatpush2.bf16.xpose.msra.mxu0 0
    %579 = vmatprep.subr.bf16.mxu0 0
    %580 = vmatpush2.bf16.xpose.msra.mxu0 0
    %581 = vmatprep.subr.bf16.mxu0 0
    %582 = vmatpush2.bf16.xpose.msra.mxu0 0
    %583 = vmatprep.subr.bf16.mxu0 0
    %584 = vmatpush2.bf16.xpose.msra.mxu0 0
    %585 = vmatprep.subr.bf16.mxu0 0
    %586 = vmatpush2.bf16.xpose.msra.mxu0 0
    %587 = vmatprep.subr.bf16.mxu0 0
    %588 = vmatpush2.bf16.xpose.msra.mxu0 0
    %589 = vmatprep.subr.bf16.mxu0 0
    %590 = vmatpush2.bf16.xpose.msra.mxu0 0
    %591 = vmatprep.mubr.bf16.mxu0 0
    %592 = vmatmul.mubr.bf16.gmra.mxu0 %v545
    %v593 = vpop.f32.mrf.mxu0
    %v594 = vadd.f32 %v274, %v593
    %v595 = vpop.f32.mrf.mxu0
    %v596 = vpop.f32.mrf.mxu0
    %v597 = vadd.f32 %v275, %v596
    %v598 = vpop.f32.mrf.mxu0
    %599 = vdwg.mxu0
    %v600 = vsel %vm295, %v594, -inf
    %601 = vmax.xlane.f32.xlu0 %v600
    %v602 = vpop.xlane.xlu0 %601
    %v603 = vsel %vm295, %v597, -inf
    %604 = vmax.xlane.f32.xlu0 %v603
    %v605 = vpop.xlane.xlu0 %604
    %v606 = vsub.f32 %v594, %v602
    %v607 = vsub.f32 %v597, %v605
    %v608 = vmul.f32 %v606, 1.442695
    %v609 = vpow.pop %v608
    %v610 = vmul.f32 %v607, 1.442695
    %v611 = vpow.pop %v610
    %620 = vrot.lane.b32.xlu0 %v284, 64
    %v621 = vpop.permute.xlu0 %620
    %622 = vrot.lane.b32.xlu0 %v285, 64
    %v623 = vpop.permute.xlu0 %622
    %624 = vrot.lane.b32.xlu0 %v286, 64
    %v625 = vpop.permute.xlu0 %624
    %626 = vrot.lane.b32.xlu0 %v287, 64
    %v627 = vpop.permute.xlu0 %626
    %628 = vrot.lane.b32.xlu0 %v288, 64
    %v629 = vpop.permute.xlu0 %628
    %630 = vrot.lane.b32.xlu0 %v289, 64
    %v631 = vpop.permute.xlu0 %630
    %632 = vrot.lane.b32.xlu0 %v290, 64
    %v633 = vpop.permute.xlu0 %632
    %634 = vrot.lane.b32.xlu0 %v291, 64
    %v635 = vpop.permute.xlu0 %634
    %v644 = vsel %vm295, %v531, %v621
    %v645 = vsel %vm295, %v532, %v623
    %v646 = vsel %vm295, %v533, %v625
    %v647 = vsel %vm295, %v534, %v627
    %v648 = vsel %vm295, %v535, %v629
    %v649 = vsel %vm295, %v536, %v631
    %v650 = vsel %vm295, %v537, %v633
    %v651 = vsel %vm295, %v538, %v635
    %v652 = vpack.c.bf16 %v611, %v609
    %v653 = vpack.c.bf16 %v645, %v644
    %v654 = vpack.c.bf16 %v647, %v646
    %v655 = vpack.c.bf16 %v649, %v648
    %v656 = vpack.c.bf16 %v651, %v650
    %v658 = vsel %vm295, %v652, 0
    %660 = vmatprep.subr.bf16.mxu0 0
    %661 = vmatpush1.bf16.msra.mxu0 0
    %662 = vmatprep.subr.bf16.mxu0 0
    %663 = vmatpush1.bf16.msra.mxu0 0
    %664 = vmatprep.subr.bf16.mxu0 0
    %665 = vmatpush1.bf16.msra.mxu0 0
    %666 = vmatprep.subr.bf16.mxu0 0
    %667 = vmatpush1.bf16.msra.mxu0 0
    %668 = vmatprep.subr.bf16.mxu0 0
    %669 = vmatpush1.bf16.msra.mxu0 %v656
    %670 = vmatprep.subr.bf16.mxu0 0
    %671 = vmatpush1.bf16.msra.mxu0 %v655
    %672 = vmatprep.subr.bf16.mxu0 0
    %673 = vmatpush1.bf16.msra.mxu0 %v654
    %674 = vmatprep.subr.bf16.mxu0 0
    %675 = vmatpush1.bf16.msra.mxu0 %v653
    %676 = vmatprep.subr.bf16.mxu0 0
    %677 = vmatpush2.bf16.msra.mxu0 0
    %678 = vmatprep.subr.bf16.mxu0 0
    %679 = vmatpush2.bf16.msra.mxu0 0
    %680 = vmatprep.subr.bf16.mxu0 0
    %681 = vmatpush2.bf16.msra.mxu0 0
    %682 = vmatprep.subr.bf16.mxu0 0
    %683 = vmatpush2.bf16.msra.mxu0 0
    %684 = vmatprep.subr.bf16.mxu0 0
    %685 = vmatpush2.bf16.msra.mxu0 0
    %686 = vmatprep.subr.bf16.mxu0 0
    %687 = vmatpush2.bf16.msra.mxu0 0
    %688 = vmatprep.subr.bf16.mxu0 0
    %689 = vmatpush2.bf16.msra.mxu0 0
    %690 = vmatprep.subr.bf16.mxu0 0
    %691 = vmatpush2.bf16.msra.mxu0 0
    %692 = vmatprep.mubr.bf16.mxu0 0
    %693 = vmatmul.mubr.bf16.gmra.mxu0 %v658
    %v694 = vpop.f32.mrf.mxu0
    %v695 = vadd.f32 0.0, %v694
    %v696 = vpop.f32.mrf.mxu0
    %v697 = vpop.f32.mrf.mxu0
    %v698 = vadd.f32 0.0, %v697
    %v699 = vpop.f32.mrf.mxu0
    %700 = vdwg.mxu0
    %v701 = vrcp.pop %v695
    %v702 = vrcp.pop %v698
    %705 = vrot.lane.b32.xlu0 %v701, 64
    %v706 = vpop.permute.xlu0 %705
    %707 = vrot.lane.b32.xlu0 %v702, 64
    %v708 = vpop.permute.xlu0 %707
    %v711 = vmul.f32 %v695, %v706
    %v712 = vmul.f32 %v698, %v708
    %v713 = vpack.c.bf16 %v712, %v711
    %v714 = vld [vmem:[#allocation14] sm:$0xf]
    %v715 = vld [vmem:[#allocation14 + $0x4] sm:$0xf]
    %v716 = vld [vmem:[#allocation14 + $0x8] sm:$0xf]
    %v717 = vld [vmem:[#allocation14 + $0xc] sm:$0xf]
    %v718 = vld [vmem:[#allocation14 + $0x10] sm:$0xf]
    %v719 = vld [vmem:[#allocation14 + $0x14] sm:$0xf]
    %v720 = vld [vmem:[#allocation14 + $0x18] sm:$0xf]
    %v721 = vld [vmem:[#allocation14 + $0x1c] sm:$0xf]
    %v730 = vunpack.c.l.b16 %v714
    %v731 = vunpack.c.l.b16 %v715
    %v732 = vunpack.c.l.b16 %v716
    %v733 = vunpack.c.l.b16 %v717
    %v734 = vunpack.c.l.b16 %v718
    %v735 = vunpack.c.l.b16 %v719
    %v736 = vunpack.c.l.b16 %v720
    %v737 = vunpack.c.l.b16 %v721
    %v738 = vpack.c.b16 %v731, %v730
    %v739 = vpack.c.b16 %v733, %v732
    %v740 = vpack.c.b16 %v735, %v734
    %v741 = vpack.c.b16 %v737, %v736
    %v747 = vsel %vm295, %v713, 0
    %749 = vmatprep.subr.bf16.mxu0 0
    %750 = vmatpush1.bf16.msra.mxu0 0
    %751 = vmatprep.subr.bf16.mxu0 0
    %752 = vmatpush1.bf16.msra.mxu0 0
    %753 = vmatprep.subr.bf16.mxu0 0
    %754 = vmatpush1.bf16.msra.mxu0 0
    %755 = vmatprep.subr.bf16.mxu0 0
    %756 = vmatpush1.bf16.msra.mxu0 0
    %757 = vmatprep.subr.bf16.mxu0 0
    %758 = vmatpush1.bf16.msra.mxu0 %v741
    %759 = vmatprep.subr.bf16.mxu0 0
    %760 = vmatpush1.bf16.msra.mxu0 %v740
    %761 = vmatprep.subr.bf16.mxu0 0
    %762 = vmatpush1.bf16.msra.mxu0 %v739
    %763 = vmatprep.subr.bf16.mxu0 0
    %764 = vmatpush1.bf16.msra.mxu0 %v738
    %765 = vmatprep.subr.bf16.mxu0 0
    %766 = vmatpush2.bf16.msra.mxu0 0
    %767 = vmatprep.subr.bf16.mxu0 0
    %768 = vmatpush2.bf16.msra.mxu0 0
    %769 = vmatprep.subr.bf16.mxu0 0
    %770 = vmatpush2.bf16.msra.mxu0 0
    %771 = vmatprep.subr.bf16.mxu0 0
    %772 = vmatpush2.bf16.msra.mxu0 0
    %773 = vmatprep.subr.bf16.mxu0 0
    %774 = vmatpush2.bf16.msra.mxu0 0
    %775 = vmatprep.subr.bf16.mxu0 0
    %776 = vmatpush2.bf16.msra.mxu0 0
    %777 = vmatprep.subr.bf16.mxu0 0
    %778 = vmatpush2.bf16.msra.mxu0 0
    %779 = vmatprep.subr.bf16.mxu0 0
    %780 = vmatpush2.bf16.msra.mxu0 0
    %781 = vmatprep.mubr.bf16.mxu0 0
    %782 = vmatmul.mubr.bf16.gmra.mxu0 %v747
    %v783 = vpop.f32.mrf.mxu0
    %v784 = vadd.f32 0.0, %v783
    %v785 = vpop.f32.mrf.mxu0
    %v786 = vpop.f32.mrf.mxu0
    %v787 = vadd.f32 0.0, %v786
    %v788 = vpop.f32.mrf.mxu0
    %789 = vdwg.mxu0
    %v790 = vadd.f32 %v268, %v784
    %v791 = vadd.f32 %v269, %v787
    %v792 = vld [vmem:[%s9] sm:$0x1]
    %v793 = vmul.f32 %v790, %v790
    %v794 = vmul.f32 %v791, %v791
    %v795 = vsel %vm295, %v793, 0.0
    %796 = vadd.xlane.f32.xlu0 %v795
    %v797 = vpop.xlane.xlu0 %796
    %v798 = vsel %vm295, %v794, 0.0
    %799 = vadd.xlane.f32.xlu0 %v798
    %v800 = vpop.xlane.xlu0 %799
    %v801 = vmul.f32 %v797, %v302
    %v802 = vmul.f32 %v800, %v302
    %v803 = vadd.f32 %v801, 1e-05
    %v804 = vadd.f32 %v802, 1e-05
    %v805 = vrsqrt.pop %v803
    %v806 = vrsqrt.pop %v804
    %v807 = vmul.f32 %v790, %v805
    %v808 = vmul.f32 %v791, %v806
    %v810 = vlaneseq
    %v811 = vshrl.u32 %v810, 7
    %v812 = vsub.s32 0, %v811
    %v813 = vrot.slane %v792, %v812
    %v815 = vmul.f32 %v813, %v807
    %v816 = vmul.f32 %v813, %v808
    %s817 = smul.u32 4, 8
    %s818 = smul.u32 %s817, 4
    %s819 = sshll.u32 %s818, 4
    %820 = dma.done [#allocation4], %s819
    %v821 = vpack.c.bf16 %v816, %v815
    %v822 = vld [vmem:[#allocation2] sm:$0xff]
    %v823 = vld [vmem:[#allocation2 + $0x8] sm:$0xff]
    %v824 = vld [vmem:[#allocation2 + $0x10] sm:$0xff]
    %v825 = vld [vmem:[#allocation2 + $0x18] sm:$0xff]
    %v826 = vld [vmem:[#allocation2 + $0x20] sm:$0xff]
    %v827 = vld [vmem:[#allocation2 + $0x28] sm:$0xff]
    %v828 = vld [vmem:[#allocation2 + $0x30] sm:$0xff]
    %v829 = vld [vmem:[#allocation2 + $0x38] sm:$0xff]
    %v830 = vld [vmem:[#allocation2 + $0x40] sm:$0xff]
    %v831 = vld [vmem:[#allocation2 + $0x48] sm:$0xff]
    %v832 = vld [vmem:[#allocation2 + $0x50] sm:$0xff]
    %v833 = vld [vmem:[#allocation2 + $0x58] sm:$0xff]
    %v834 = vld [vmem:[#allocation2 + $0x60] sm:$0xff]
    %v835 = vld [vmem:[#allocation2 + $0x68] sm:$0xff]
    %v836 = vld [vmem:[#allocation2 + $0x70] sm:$0xff]
    %v837 = vld [vmem:[#allocation2 + $0x78] sm:$0xff]
    %v854 = vunpack.c.l.b16 %v822
    %v855 = vunpack.c.h.b16 %v822
    %v856 = vunpack.c.l.b16 %v823
    %v857 = vunpack.c.h.b16 %v823
    %v858 = vunpack.c.l.b16 %v824
    %v859 = vunpack.c.h.b16 %v824
    %v860 = vunpack.c.l.b16 %v825
    %v861 = vunpack.c.h.b16 %v825
    %v862 = vunpack.c.l.b16 %v826
    %v863 = vunpack.c.h.b16 %v826
    %v864 = vunpack.c.l.b16 %v827
    %v865 = vunpack.c.h.b16 %v827
    %v866 = vunpack.c.l.b16 %v828
    %v867 = vunpack.c.h.b16 %v828
    %v868 = vunpack.c.l.b16 %v829
    %v869 = vunpack.c.h.b16 %v829
    %v870 = vunpack.c.l.b16 %v830
    %v871 = vunpack.c.h.b16 %v830
    %v872 = vunpack.c.l.b16 %v831
    %v873 = vunpack.c.h.b16 %v831
    %v874 = vunpack.c.l.b16 %v832
    %v875 = vunpack.c.h.b16 %v832
    %v876 = vunpack.c.l.b16 %v833
    %v877 = vunpack.c.h.b16 %v833
    %v878 = vunpack.c.l.b16 %v834
    %v879 = vunpack.c.h.b16 %v834
    %v880 = vunpack.c.l.b16 %v835
    %v881 = vunpack.c.h.b16 %v835
    %v882 = vunpack.c.l.b16 %v836
    %v883 = vunpack.c.h.b16 %v836
    %v884 = vunpack.c.l.b16 %v837
    %v885 = vunpack.c.h.b16 %v837
    %v886 = vpack.c.b16 %v858, %v854
    %v887 = vpack.c.b16 %v859, %v855
    %v888 = vpack.c.b16 %v860, %v856
    %v889 = vpack.c.b16 %v861, %v857
    %v890 = vpack.c.b16 %v866, %v862
    %v891 = vpack.c.b16 %v867, %v863
    %v892 = vpack.c.b16 %v868, %v864
    %v893 = vpack.c.b16 %v869, %v865
    %v894 = vpack.c.b16 %v874, %v870
    %v895 = vpack.c.b16 %v875, %v871
    %v896 = vpack.c.b16 %v876, %v872
    %v897 = vpack.c.b16 %v877, %v873
    %v898 = vpack.c.b16 %v882, %v878
    %v899 = vpack.c.b16 %v883, %v879
    %v900 = vpack.c.b16 %v884, %v880
    %v901 = vpack.c.b16 %v885, %v881
    %v919 = vsel %vm295, %v821, 0
    %921 = vmatprep.subr.bf16.mxu0 0
    %922 = vmatpush1.bf16.msra.mxu0 0
    %923 = vmatprep.subr.bf16.mxu0 0
    %924 = vmatpush1.bf16.msra.mxu0 0
    %925 = vmatprep.subr.bf16.mxu0 0
    %926 = vmatpush1.bf16.msra.mxu0 0
    %927 = vmatprep.subr.bf16.mxu0 0
    %928 = vmatpush1.bf16.msra.mxu0 0
    %929 = vmatprep.subr.bf16.mxu0 %v899
    %930 = vmatpush1.bf16.msra.mxu0 %v898
    %931 = vmatprep.subr.bf16.mxu0 %v895
    %932 = vmatpush1.bf16.msra.mxu0 %v894
    %933 = vmatprep.subr.bf16.mxu0 %v891
    %934 = vmatpush1.bf16.msra.mxu0 %v890
    %935 = vmatprep.subr.bf16.mxu0 %v887
    %936 = vmatpush1.bf16.msra.mxu0 %v886
    %937 = vmatprep.subr.bf16.mxu0 0
    %938 = vmatpush2.bf16.msra.mxu0 0
    %939 = vmatprep.subr.bf16.mxu0 0
    %940 = vmatpush2.bf16.msra.mxu0 0
    %941 = vmatprep.subr.bf16.mxu0 0
    %942 = vmatpush2.bf16.msra.mxu0 0
    %943 = vmatprep.subr.bf16.mxu0 0
    %944 = vmatpush2.bf16.msra.mxu0 0
    %945 = vmatprep.subr.bf16.mxu0 0
    %946 = vmatpush2.bf16.msra.mxu0 0
    %947 = vmatprep.subr.bf16.mxu0 0
    %948 = vmatpush2.bf16.msra.mxu0 0
    %949 = vmatprep.subr.bf16.mxu0 0
    %950 = vmatpush2.bf16.msra.mxu0 0
    %951 = vmatprep.subr.bf16.mxu0 0
    %952 = vmatpush2.bf16.msra.mxu0 0
    %953 = vmatprep.mubr.bf16.mxu0 0
    %954 = vmatmul.mubr.bf16.gmra.mxu0 %v919
    %v955 = vpop.f32.mrf.mxu0
    %v956 = vadd.f32 0.0, %v955
    %v957 = vpop.f32.mrf.mxu0
    %v958 = vadd.f32 0.0, %v957
    %v959 = vpop.f32.mrf.mxu0
    %v960 = vadd.f32 0.0, %v959
    %v961 = vpop.f32.mrf.mxu0
    %v962 = vadd.f32 0.0, %v961
    %963 = vdwg.mxu0
    %964 = vmatprep.subr.bf16.mxu0 0
    %965 = vmatpush1.bf16.msra.mxu0 0
    %966 = vmatprep.subr.bf16.mxu0 0
    %967 = vmatpush1.bf16.msra.mxu0 0
    %968 = vmatprep.subr.bf16.mxu0 0
    %969 = vmatpush1.bf16.msra.mxu0 0
    %970 = vmatprep.subr.bf16.mxu0 0
    %971 = vmatpush1.bf16.msra.mxu0 0
    %972 = vmatprep.subr.bf16.mxu0 %v901
    %973 = vmatpush1.bf16.msra.mxu0 %v900
    %974 = vmatprep.subr.bf16.mxu0 %v897
    %975 = vmatpush1.bf16.msra.mxu0 %v896
    %976 = vmatprep.subr.bf16.mxu0 %v893
    %977 = vmatpush1.bf16.msra.mxu0 %v892
    %978 = vmatprep.subr.bf16.mxu0 %v889
    %979 = vmatpush1.bf16.msra.mxu0 %v888
    %980 = vmatprep.subr.bf16.mxu0 0
    %981 = vmatpush2.bf16.msra.mxu0 0
    %982 = vmatprep.subr.bf16.mxu0 0
    %983 = vmatpush2.bf16.msra.mxu0 0
    %984 = vmatprep.subr.bf16.mxu0 0
    %985 = vmatpush2.bf16.msra.mxu0 0
    %986 = vmatprep.subr.bf16.mxu0 0
    %987 = vmatpush2.bf16.msra.mxu0 0
    %988 = vmatprep.subr.bf16.mxu0 0
    %989 = vmatpush2.bf16.msra.mxu0 0
    %990 = vmatprep.subr.bf16.mxu0 0
    %991 = vmatpush2.bf16.msra.mxu0 0
    %992 = vmatprep.subr.bf16.mxu0 0
    %993 = vmatpush2.bf16.msra.mxu0 0
    %994 = vmatprep.subr.bf16.mxu0 0
    %995 = vmatpush2.bf16.msra.mxu0 0
    %996 = vmatprep.mubr.bf16.mxu0 0
    %997 = vmatmul.mubr.bf16.gmra.mxu0 %v919
    %v998 = vpop.f32.mrf.mxu0
    %v999 = vadd.f32 0.0, %v998
    %v1000 = vpop.f32.mrf.mxu0
    %v1001 = vadd.f32 0.0, %v1000
    %v1002 = vpop.f32.mrf.mxu0
    %v1003 = vadd.f32 0.0, %v1002
    %v1004 = vpop.f32.mrf.mxu0
    %v1005 = vadd.f32 0.0, %v1004
    %1006 = vdwg.mxu0
    %v1007 = vxor.u32 %v956, 2147483648
    %v1008 = vxor.u32 %v958, 2147483648
    %v1009 = vxor.u32 %v960, 2147483648
    %v1010 = vxor.u32 %v962, 2147483648
    %v1011 = vmul.f32 %v1007, 1.442695
    %v1012 = vpow.pop %v1011
    %v1013 = vmul.f32 %v1008, 1.442695
    %v1014 = vpow.pop %v1013
    %v1015 = vmul.f32 %v1009, 1.442695
    %v1016 = vpow.pop %v1015
    %v1017 = vmul.f32 %v1010, 1.442695
    %v1018 = vpow.pop %v1017
    %v1019 = vadd.f32 %v1012, 1.0
    %v1020 = vadd.f32 %v1014, 1.0
    %v1021 = vadd.f32 %v1016, 1.0
    %v1022 = vadd.f32 %v1018, 1.0
    %v1023 = vrcp.pop %v1019
    %v1024 = vmul.f32 1.0, %v1023
    %v1025 = vrcp.pop %v1020
    %v1026 = vmul.f32 1.0, %v1025
    %v1027 = vrcp.pop %v1021
    %v1028 = vmul.f32 1.0, %v1027
    %v1029 = vrcp.pop %v1022
    %v1030 = vmul.f32 1.0, %v1029
    %v1031 = vmul.f32 %v956, %v1024
    %v1032 = vmul.f32 %v958, %v1026
    %v1033 = vmul.f32 %v960, %v1028
    %v1034 = vmul.f32 %v962, %v1030
    %v1035 = vmul.f32 %v1031, %v999
    %v1036 = vmul.f32 %v1032, %v1001
    %v1037 = vmul.f32 %v1033, %v1003
    %v1038 = vmul.f32 %v1034, %v1005
    %s1039 = smul.u32 4, 32
    %s1040 = smul.u32 %s1039, 1
    %s1041 = sshll.u32 %s1040, 4
    %1042 = dma.done %s194, %s1041
    %v1043 = vpack.c.bf16 %v1037, %v1035
    %v1044 = vpack.c.bf16 %v1038, %v1036
    %v1045 = vld [vmem:[#allocation3] sm:$0xf]
    %v1046 = vld [vmem:[#allocation3 + $0x4] sm:$0xf]
    %v1047 = vld [vmem:[#allocation3 + $0x8] sm:$0xf]
    %v1048 = vld [vmem:[#allocation3 + $0xc] sm:$0xf]
    %v1049 = vld [vmem:[#allocation3 + $0x10] sm:$0xf]
    %v1050 = vld [vmem:[#allocation3 + $0x14] sm:$0xf]
    %v1051 = vld [vmem:[#allocation3 + $0x18] sm:$0xf]
    %v1052 = vld [vmem:[#allocation3 + $0x1c] sm:$0xf]
    %v1053 = vld [vmem:[#allocation3 + $0x20] sm:$0xf]
    %v1054 = vld [vmem:[#allocation3 + $0x24] sm:$0xf]
    %v1055 = vld [vmem:[#allocation3 + $0x28] sm:$0xf]
    %v1056 = vld [vmem:[#allocation3 + $0x2c] sm:$0xf]
    %v1057 = vld [vmem:[#allocation3 + $0x30] sm:$0xf]
    %v1058 = vld [vmem:[#allocation3 + $0x34] sm:$0xf]
    %v1059 = vld [vmem:[#allocation3 + $0x38] sm:$0xf]
    %v1060 = vld [vmem:[#allocation3 + $0x3c] sm:$0xf]
    %v1061 = vld [vmem:[#allocation3 + $0x40] sm:$0xf]
    %v1062 = vld [vmem:[#allocation3 + $0x44] sm:$0xf]
    %v1063 = vld [vmem:[#allocation3 + $0x48] sm:$0xf]
    %v1064 = vld [vmem:[#allocation3 + $0x4c] sm:$0xf]
    %v1065 = vld [vmem:[#allocation3 + $0x50] sm:$0xf]
    %v1066 = vld [vmem:[#allocation3 + $0x54] sm:$0xf]
    %v1067 = vld [vmem:[#allocation3 + $0x58] sm:$0xf]
    %v1068 = vld [vmem:[#allocation3 + $0x5c] sm:$0xf]
    %v1069 = vld [vmem:[#allocation3 + $0x60] sm:$0xf]
    %v1070 = vld [vmem:[#allocation3 + $0x64] sm:$0xf]
    %v1071 = vld [vmem:[#allocation3 + $0x68] sm:$0xf]
    %v1072 = vld [vmem:[#allocation3 + $0x6c] sm:$0xf]
    %v1073 = vld [vmem:[#allocation3 + $0x70] sm:$0xf]
    %v1074 = vld [vmem:[#allocation3 + $0x74] sm:$0xf]
    %v1075 = vld [vmem:[#allocation3 + $0x78] sm:$0xf]
    %v1076 = vld [vmem:[#allocation3 + $0x7c] sm:$0xf]
    %v1109 = vunpack.c.l.b16 %v1045
    %v1110 = vunpack.c.l.b16 %v1046
    %v1111 = vunpack.c.l.b16 %v1047
    %v1112 = vunpack.c.l.b16 %v1048
    %v1113 = vunpack.c.l.b16 %v1049
    %v1114 = vunpack.c.l.b16 %v1050
    %v1115 = vunpack.c.l.b16 %v1051
    %v1116 = vunpack.c.l.b16 %v1052
    %v1117 = vunpack.c.l.b16 %v1053
    %v1118 = vunpack.c.l.b16 %v1054
    %v1119 = vunpack.c.l.b16 %v1055
    %v1120 = vunpack.c.l.b16 %v1056
    %v1121 = vunpack.c.l.b16 %v1057
    %v1122 = vunpack.c.l.b16 %v1058
    %v1123 = vunpack.c.l.b16 %v1059
    %v1124 = vunpack.c.l.b16 %v1060
    %v1125 = vunpack.c.l.b16 %v1061
    %v1126 = vunpack.c.l.b16 %v1062
    %v1127 = vunpack.c.l.b16 %v1063
    %v1128 = vunpack.c.l.b16 %v1064
    %v1129 = vunpack.c.l.b16 %v1065
    %v1130 = vunpack.c.l.b16 %v1066
    %v1131 = vunpack.c.l.b16 %v1067
    %v1132 = vunpack.c.l.b16 %v1068
    %v1133 = vunpack.c.l.b16 %v1069
    %v1134 = vunpack.c.l.b16 %v1070
    %v1135 = vunpack.c.l.b16 %v1071
    %v1136 = vunpack.c.l.b16 %v1072
    %v1137 = vunpack.c.l.b16 %v1073
    %v1138 = vunpack.c.l.b16 %v1074
    %v1139 = vunpack.c.l.b16 %v1075
    %v1140 = vunpack.c.l.b16 %v1076
    %v1141 = vpack.c.b16 %v1110, %v1109
    %v1142 = vpack.c.b16 %v1112, %v1111
    %v1143 = vpack.c.b16 %v1114, %v1113
    %v1144 = vpack.c.b16 %v1116, %v1115
    %v1145 = vpack.c.b16 %v1118, %v1117
    %v1146 = vpack.c.b16 %v1120, %v1119
    %v1147 = vpack.c.b16 %v1122, %v1121
    %v1148 = vpack.c.b16 %v1124, %v1123
    %v1149 = vpack.c.b16 %v1126, %v1125
    %v1150 = vpack.c.b16 %v1128, %v1127
    %v1151 = vpack.c.b16 %v1130, %v1129
    %v1152 = vpack.c.b16 %v1132, %v1131
    %v1153 = vpack.c.b16 %v1134, %v1133
    %v1154 = vpack.c.b16 %v1136, %v1135
    %v1155 = vpack.c.b16 %v1138, %v1137
    %v1156 = vpack.c.b16 %v1140, %v1139
    %1173 = vmatprep.subr.bf16.mxu0 0
    %1174 = vmatpush1.bf16.msra.mxu0 %v1148
    %1175 = vmatprep.subr.bf16.mxu0 0
    %1176 = vmatpush1.bf16.msra.mxu0 %v1147
    %1177 = vmatprep.subr.bf16.mxu0 0
    %1178 = vmatpush1.bf16.msra.mxu0 %v1146
    %1179 = vmatprep.subr.bf16.mxu0 0
    %1180 = vmatpush1.bf16.msra.mxu0 %v1145
    %1181 = vmatprep.subr.bf16.mxu0 0
    %1182 = vmatpush1.bf16.msra.mxu0 %v1144
    %1183 = vmatprep.subr.bf16.mxu0 0
    %1184 = vmatpush1.bf16.msra.mxu0 %v1143
    %1185 = vmatprep.subr.bf16.mxu0 0
    %1186 = vmatpush1.bf16.msra.mxu0 %v1142
    %1187 = vmatprep.subr.bf16.mxu0 0
    %1188 = vmatpush1.bf16.msra.mxu0 %v1141
    %1189 = vmatprep.subr.bf16.mxu0 0
    %1190 = vmatpush2.bf16.msra.mxu0 %v1156
    %1191 = vmatprep.subr.bf16.mxu0 0
    %1192 = vmatpush2.bf16.msra.mxu0 %v1155
    %1193 = vmatprep.subr.bf16.mxu0 0
    %1194 = vmatpush2.bf16.msra.mxu0 %v1154
    %1195 = vmatprep.subr.bf16.mxu0 0
    %1196 = vmatpush2.bf16.msra.mxu0 %v1153
    %1197 = vmatprep.subr.bf16.mxu0 0
    %1198 = vmatpush2.bf16.msra.mxu0 %v1152
    %1199 = vmatprep.subr.bf16.mxu0 0
    %1200 = vmatpush2.bf16.msra.mxu0 %v1151
    %1201 = vmatprep.subr.bf16.mxu0 0
    %1202 = vmatpush2.bf16.msra.mxu0 %v1150
    %1203 = vmatprep.subr.bf16.mxu0 0
    %1204 = vmatpush2.bf16.msra.mxu0 %v1149
    %1205 = vmatprep.mubr.bf16.mxu0 %v1044
    %1206 = vmatmul.mubr.bf16.gmra.mxu0 %v1043
    %v1207 = vpop.f32.mrf.mxu0
    %v1208 = vadd.f32 0.0, %v1207
    %v1209 = vpop.f32.mrf.mxu0
    %v1210 = vpop.f32.mrf.mxu0
    %v1211 = vadd.f32 0.0, %v1210
    %v1212 = vpop.f32.mrf.mxu0
    %1213 = vdwg.mxu0
    %v1214 = vadd.f32 %v790, %v1208
    %v1215 = vadd.f32 %v791, %v1211
    %1216 = vst.msk [vmem:[#allocation16] sm:$0xff] %vm295, %v1214
    %1217 = vst.msk [vmem:[#allocation16 + $0x8] sm:$0xff] %vm295, %v1215
    // Predicated region
    $region134: #{decoder_layer.1} parent=1 // pred_check
      _
    $region135: #{decoder_layer.1} parent=1 // pred_check_branch
      %1219 = sbr.rel (0) target = $region137
    $region136: #{decoder_layer.1} parent=1 // pred_region
      %s1221 = ssub.s32 256, 256
      %1222 = vsyncadd [#allocation7], %s1221
      %s1223 = sshll.u32 [#allocation16], 4
      %s1224 = int_to_ptr.vmem [resolvable:$true] %s1223
      %1229 = dma.vmem_to_hbm [thread:$0]  %s1224, 256, %s12, [#allocation7], 128, 128, 8
    $region137: #{decoder_layer.1} parent=1 // pred_fallthru
      _
    // Predicated region
    $region138: #{decoder_layer.1} parent=1 // pred_check
      _
    $region139: #{decoder_layer.1} parent=1 // pred_check_branch
      %1231 = sbr.rel (0) target = $region141
    $region140: #{decoder_layer.1} parent=1 // pred_region
      %1232 = dma.done [#allocation7], 256
    $region141: #{decoder_layer.1} parent=1 // pred_fallthru
      _
    %1233 = vsyncpa [#allocation6], 1
    %1234 = vsyncpa [#allocation9], 1
    %1235 = vsyncpa [#allocation12], 1
    %1236 = vsyncpa [#allocation15], 1
    %1237 = vsyncpa [#allocation7], 1
  %1238 = vsyncmov [#allocation4]
  %s1239 = vpop.sfrf %1238
  %p1240 = scmp.eq.s32.totalorder %s1239, 0
  %p1241 = pneg %p1240
  %1243 = shalt.err (%p1241)
  %s1244 = scalar_lea.sflag [#allocation4], 1
  %1245 = vsyncmov %s1244
  %s1246 = vpop.sfrf %1245
  %p1247 = scmp.eq.s32.totalorder %s1246, 0
  %p1248 = pneg %p1247
  %1250 = shalt.err (%p1248)

</llo_original>
